<compile_context>
chip_gen: v5e
topology: v5e:2x2
jax: 0.10.0
libtpu: 0.0.40
codegen_flags: <defaults>
</compile_context>

<pallas_src>
import jax
import jax.numpy as jnp
from jax.experimental import pallas as pl
from jax.experimental.pallas import tpu as pltpu

# Problem sizes taken straight from the PyTorch module:
#   conv2d92: 48 -> 1152 (1x1, bias)   on x282 [1, 48, 1, 1]
#   sigmoid, broadcast-mul with x279 [1, 1152, 7, 7]
#   conv2d93: 1152 -> 192 (1x1, no bias)
C_IN_SE = 48      # channels of x282
C_MID   = 1152    # channels of x279 / output of conv2d92
C_OUT   = 192     # output channels of conv2d93
H = W = 7
HW = H * W


def se_conv_kernel(x_ref, se_ref, w1t_ref, b1_ref, w2_ref, out_ref):
    """out = conv2d93( sigmoid(conv2d92(se)) * x )   (1x1 convs as matmuls)

    x_ref  : (C_MID, HW)       f32   x279 as a channel-major matrix
    se_ref : (1, C_IN_SE)      f32   x282 squeeze vector as a row
    w1t_ref: (C_IN_SE, C_MID)  bf16  conv2d92 weight, pre-transposed
    b1_ref : (1, C_MID)        f32   conv2d92 bias as a row
    w2_ref : (C_OUT, C_MID)    bf16  conv2d93 weight
    out_ref: (C_OUT, HW)       f32
    """
    # conv2d92 on the 1x1 squeeze input == (1,48)x(48,1152) matmul on the MXU.
    # The gate comes out as a lane-dense (1, 1152) row; bias add + sigmoid in f32.
    logits = jnp.dot(se_ref[...].astype(jnp.bfloat16), w1t_ref[...],
                     preferred_element_type=jnp.float32) + b1_ref[...]
    gate = jax.nn.sigmoid(logits)                      # (1, C_MID) f32, EUP

    # Fold the per-channel gate into w2's columns: the gate's lane axis
    # (C_MID) lines up with w2's lane axis, so this is a free sublane
    # broadcast (no relayout of the gate into a (C_MID, 1) column).
    w2_scaled = (w2_ref[...].astype(jnp.float32) * gate).astype(jnp.bfloat16)

    # conv2d93 (1x1) == matmul over the channel dim on the MXU; f32 accumulate.
    out_ref[...] = jnp.dot(w2_scaled, x_ref[...].astype(jnp.bfloat16),
                           preferred_element_type=jnp.float32)


def prepare_params(w1, b1, w2):
    """One-time layout + dtype plumbing of the conv parameters (run ONCE,
    outside the per-call jit), so the forward pass issues no convert or
    transpose ops and the weight HBM stream is bf16 (~550 KB)."""
    w1t_bf16 = jnp.asarray(w1.reshape(C_MID, C_IN_SE).T, dtype=jnp.bfloat16)
    b1_row   = jnp.asarray(b1.reshape(1, C_MID), dtype=jnp.float32)
    w2_bf16  = jnp.asarray(w2.reshape(C_OUT, C_MID), dtype=jnp.bfloat16)
    return w1t_bf16, b1_row, w2_bf16


@jax.jit
def se_conv_forward(x282, x279, w1t_bf16, b1_row, w2_bf16):
    """x282: (1, C_IN_SE, 1, 1) f32   x279: (1, C_MID, H, W) f32
       w1t_bf16: (C_IN_SE, C_MID) bf16   b1_row: (1, C_MID) f32
       w2_bf16:  (C_OUT, C_MID) bf16
       returns (1, C_OUT, H, W) f32 -- matches PyTorch NCHW semantics."""
    # Only free contiguous reshapes here -- no per-call casts/transposes.
    x_mat  = x279.reshape(C_MID, HW)      # (1152, 49) f32
    se_row = x282.reshape(1, C_IN_SE)     # (1, 48)    f32

    cost = pl.CostEstimate(
        flops=(2 * C_IN_SE * C_MID          # conv2d92 matvec
               + C_OUT * C_MID              # gate folding into w2
               + 2 * C_OUT * C_MID * HW),   # conv2d93 matmul
        transcendentals=C_MID,
        bytes_accessed=(x_mat.size * 4 + se_row.size * 4 + w1t_bf16.size * 2 +
                        b1_row.size * 4 + w2_bf16.size * 2 + C_OUT * HW * 4))

    out_mat = pl.pallas_call(
        se_conv_kernel,
        out_shape=jax.ShapeDtypeStruct((C_OUT, HW), jnp.float32),
        grid_spec=pltpu.PrefetchScalarGridSpec(
            num_scalar_prefetch=0,
            grid=(1,),                      # single step; whole-operand blocks
            in_specs=[
                pl.BlockSpec((C_MID, HW),      lambda i: (0, 0)),   # x279
                pl.BlockSpec((1, C_IN_SE),     lambda i: (0, 0)),   # x282 row
                pl.BlockSpec((C_IN_SE, C_MID), lambda i: (0, 0)),   # w1^T
                pl.BlockSpec((1, C_MID),       lambda i: (0, 0)),   # b1 row
                pl.BlockSpec((C_OUT, C_MID),   lambda i: (0, 0)),   # w2
            ],
            out_specs=pl.BlockSpec((C_OUT, HW), lambda i: (0, 0)),
        ),
        compiler_params=pltpu.CompilerParams(
            dimension_semantics=("arbitrary",)),
        cost_estimate=cost,
    )(x_mat, se_row, w1t_bf16, b1_row, w2_bf16)

    return out_mat.reshape(1, C_OUT, H, W)


def reference_forward(x282, x279, w1, b1, w2):
    """Pure-JAX f32 reference of the PyTorch forward (1x1 convs as matmuls)."""
    se = jnp.dot(w1.reshape(C_MID, C_IN_SE), x282.reshape(C_IN_SE)) + b1
    se = jax.nn.sigmoid(se)                                     # (1152,)
    scaled = x279.reshape(C_MID, HW) * se[:, None]
    out = jnp.dot(w2.reshape(C_OUT, C_MID), scaled)
    return out.reshape(1, C_OUT, H, W)


if __name__ == "__main__":
    key = jax.random.PRNGKey(0)
    k1, k2, k3, k4, k5 = jax.random.split(key, 5)

    # Inputs (same shapes as the PyTorch module's example tensors)
    x279 = jax.random.normal(k1, (1, C_MID, H, W), dtype=jnp.float32)
    x282 = jax.random.normal(k2, (1, C_IN_SE, 1, 1), dtype=jnp.float32)

    # Deterministic parameter init (synthetic, not a checkpoint load)
    w1 = 0.05 * jax.random.normal(k3, (C_MID, C_IN_SE, 1, 1), dtype=jnp.float32)
    b1 = 0.05 * jax.random.normal(k4, (C_MID,), dtype=jnp.float32)
    w2 = 0.05 * jax.random.normal(k5, (C_OUT, C_MID, 1, 1), dtype=jnp.float32)

    # One-time parameter preparation (cached bf16 / pre-transposed layouts).
    params = jax.block_until_ready(prepare_params(w1, b1, w2))

    out = jax.block_until_ready(se_conv_forward(x282, x279, *params))
    ref = reference_forward(x282, x279, w1, b1, w2)

    assert out.shape == (1, C_OUT, H, W)
    # bf16 weights + bf16 MXU inputs (f32 accumulate / f32 gating) -> tolerance
    # vs the all-f32 reference.
    assert jnp.allclose(out, ref, atol=3e-2, rtol=3e-2), "mismatch vs reference"

    print("KERNEL_OK")
</pallas_src>

<mosaic_0001>
module attributes {stable_mosaic.version = 11 : i64} {
  func.func @se_conv_kernel(%arg0: i32, %arg1: memref<1152x49xf32, #tpu.memory_space<vmem>>, %arg2: memref<1x48xf32, #tpu.memory_space<vmem>>, %arg3: memref<48x1152xbf16, #tpu.memory_space<vmem>>, %arg4: memref<1x1152xf32, #tpu.memory_space<vmem>>, %arg5: memref<192x1152xbf16, #tpu.memory_space<vmem>>, %arg6: memref<192x49xf32, #tpu.memory_space<vmem>>) attributes {dimension_semantics = [#tpu.dimension_semantics<arbitrary>], iteration_bounds = array<i64: 1>, scalar_prefetch = 0 : i64, scratch_operands = 0 : i64, tpu.core_type = #tpu.core_type<tc>, window_params = [{pipeline_mode = #tpu.pipeline_mode<synchronous>, transform_indices = @transform_0, window_bounds = array<i64: 1152, 49>}, {pipeline_mode = #tpu.pipeline_mode<synchronous>, transform_indices = @transform_1, window_bounds = array<i64: 1, 48>}, {pipeline_mode = #tpu.pipeline_mode<synchronous>, transform_indices = @transform_2, window_bounds = array<i64: 48, 1152>}, {pipeline_mode = #tpu.pipeline_mode<synchronous>, transform_indices = @transform_3, window_bounds = array<i64: 1, 1152>}, {pipeline_mode = #tpu.pipeline_mode<synchronous>, transform_indices = @transform_4, window_bounds = array<i64: 192, 1152>}, {pipeline_mode = #tpu.pipeline_mode<synchronous>, transform_indices = @transform_5, window_bounds = array<i64: 192, 49>}]} {
    %c0 = arith.constant 0 : index
    %c0_0 = arith.constant 0 : index
    %0 = vector.load %arg2[%c0, %c0_0] : memref<1x48xf32, #tpu.memory_space<vmem>>, vector<1x48xf32>
    %1 = arith.truncf %0 : vector<1x48xf32> to vector<1x48xbf16>
    %c0_1 = arith.constant 0 : index
    %c0_2 = arith.constant 0 : index
    %2 = vector.load %arg3[%c0_1, %c0_2] : memref<48x1152xbf16, #tpu.memory_space<vmem>>, vector<48x1152xbf16>
    %cst = arith.constant dense<0.000000e+00> : vector<1x1152xf32>
    %3 = tpu.matmul %1, %2, %cst {dimension_numbers = #tpu.dot_dimension_numbers<[1], [0], [0], [1], [0, 0, 1, 1], [], []>} : vector<1x48xbf16>, vector<48x1152xbf16>, vector<1x1152xf32> -> vector<1x1152xf32>
    %c0_3 = arith.constant 0 : index
    %c0_4 = arith.constant 0 : index
    %4 = vector.load %arg4[%c0_3, %c0_4] : memref<1x1152xf32, #tpu.memory_space<vmem>>, vector<1x1152xf32>
    %5 = arith.addf %3, %4 : vector<1x1152xf32>
    %6 = arith.negf %5 : vector<1x1152xf32>
    %7 = math.exp %6 : vector<1x1152xf32>
    %cst_5 = arith.constant 1.000000e+00 : f32
    %8 = vector.broadcast %cst_5 : f32 to vector<1x1152xf32>
    %9 = arith.addf %8, %7 : vector<1x1152xf32>
    %10 = arith.divf %8, %9 : vector<1x1152xf32>
    %c0_6 = arith.constant 0 : index
    %c0_7 = arith.constant 0 : index
    %11 = vector.load %arg5[%c0_6, %c0_7] : memref<192x1152xbf16, #tpu.memory_space<vmem>>, vector<192x1152xbf16>
    %12 = arith.extf %11 : vector<192x1152xbf16> to vector<192x1152xf32>
    %13 = vector.broadcast %10 : vector<1x1152xf32> to vector<192x1152xf32>
    %14 = arith.mulf %12, %13 : vector<192x1152xf32>
    %15 = arith.truncf %14 : vector<192x1152xf32> to vector<192x1152xbf16>
    %c0_8 = arith.constant 0 : index
    %c0_9 = arith.constant 0 : index
    %16 = vector.load %arg1[%c0_8, %c0_9] : memref<1152x49xf32, #tpu.memory_space<vmem>>, vector<1152x49xf32>
    %17 = arith.truncf %16 : vector<1152x49xf32> to vector<1152x49xbf16>
    %cst_10 = arith.constant dense<0.000000e+00> : vector<192x49xf32>
    %18 = tpu.matmul %15, %17, %cst_10 {dimension_numbers = #tpu.dot_dimension_numbers<[1], [0], [0], [1], [0, 0, 1, 1], [], []>} : vector<192x1152xbf16>, vector<1152x49xbf16>, vector<192x49xf32> -> vector<192x49xf32>
    %c0_11 = arith.constant 0 : index
    %c0_12 = arith.constant 0 : index
    %19 = vector.load %arg6[%c0_11, %c0_12] : memref<192x49xf32, #tpu.memory_space<vmem>>, vector<192x49xf32>
    tpu.vector_store %arg6[%c0_11, %c0_12], %18 {strides = array<i32>} : memref<192x49xf32, #tpu.memory_space<vmem>>, vector<192x49xf32>,
    return
  }
  func.func @transform_0(%arg0: i32) -> (i32, i32) {
    %c0_i32 = arith.constant 0 : i32
    %c0_i32_0 = arith.constant 0 : i32
    %c0_i32_1 = arith.constant 0 : i32
    return %c0_i32, %c0_i32_0 : i32, i32
  }
  func.func @transform_1(%arg0: i32) -> (i32, i32) {
    %c0_i32 = arith.constant 0 : i32
    %c0_i32_0 = arith.constant 0 : i32
    %c0_i32_1 = arith.constant 0 : i32
    return %c0_i32, %c0_i32_0 : i32, i32
  }
  func.func @transform_2(%arg0: i32) -> (i32, i32) {
    %c0_i32 = arith.constant 0 : i32
    %c0_i32_0 = arith.constant 0 : i32
    %c0_i32_1 = arith.constant 0 : i32
    return %c0_i32, %c0_i32_0 : i32, i32
  }
  func.func @transform_3(%arg0: i32) -> (i32, i32) {
    %c0_i32 = arith.constant 0 : i32
    %c0_i32_0 = arith.constant 0 : i32
    %c0_i32_1 = arith.constant 0 : i32
    return %c0_i32, %c0_i32_0 : i32, i32
  }
  func.func @transform_4(%arg0: i32) -> (i32, i32) {
    %c0_i32 = arith.constant 0 : i32
    %c0_i32_0 = arith.constant 0 : i32
    %c0_i32_1 = arith.constant 0 : i32
    return %c0_i32, %c0_i32_0 : i32, i32
  }
  func.func @transform_5(%arg0: i32) -> (i32, i32) {
    %c0_i32 = arith.constant 0 : i32
    %c0_i32_0 = arith.constant 0 : i32
    %c0_i32_1 = arith.constant 0 : i32
    return %c0_i32, %c0_i32_0 : i32, i32
  }
}

</mosaic_0001>

<llo_original>
// kernel: se_conv_forward.1
$region0: #{se_conv_forward.1}
  #allocation0 [shape = 'u32[]', space=smem, size = 0x4, offset = 0x4, fixed_abs, tag = 'smem constant byte address 0x4 - core index']
  #allocation1 [shape = 'u32[72,128]{1,0:T(1,128)}', space=vmem, size = 0x9000, scoped, tag = 'internal scratch']
  %s0 = inlined_call_operand.vmem [shape: f32[1152,49], index: 0, kind: input, shape index: {}]
  %s1 = inlined_call_operand.vmem [shape: f32[1,48], index: 1, kind: input, shape index: {}]
  %s2 = inlined_call_operand.vmem [shape: bf16[48,1152], index: 2, kind: input, shape index: {}]
  %s3 = inlined_call_operand.vmem [shape: f32[1,1152], index: 3, kind: input, shape index: {}]
  %s4 = inlined_call_operand.vmem [shape: bf16[192,1152], index: 4, kind: input, shape index: {}]
  %s5 = inlined_call_operand.vmem [shape: f32[192,49], index: 5, kind: output, shape index: {}]
  %s6 = sld [smem:[#allocation0]]
  $region30: #{se_conv_forward.1} parent=0
    _
  %s8 = ssub.s32 1, %s6
  %s9 = scalar_select 0, %s8, %s6
  // Predicated region
  $region2: #{se_conv_forward.1} parent=0 // pred_check
    _
  $region3: #{se_conv_forward.1} parent=0 // pred_check_branch
    %11 = sbr.rel (0) target = $region5
  $region4: #{se_conv_forward.1} parent=0 // pred_region
    _
  $region5: #{se_conv_forward.1} parent=0 // pred_fallthru
    _
  // Predicated region
  $region6: #{se_conv_forward.1} parent=0 // pred_check
    _
  $region7: #{se_conv_forward.1} parent=0 // pred_check_branch
    %13 = sbr.rel (0) target = $region9
  $region8: #{se_conv_forward.1} parent=0 // pred_region
    _
  $region9: #{se_conv_forward.1} parent=0 // pred_fallthru
    _
  // Predicated region
  $region10: #{se_conv_forward.1} parent=0 // pred_check
    _
  $region11: #{se_conv_forward.1} parent=0 // pred_check_branch
    %15 = sbr.rel (0) target = $region13
  $region12: #{se_conv_forward.1} parent=0 // pred_region
    _
  $region13: #{se_conv_forward.1} parent=0 // pred_fallthru
    _
  // Predicated region
  $region14: #{se_conv_forward.1} parent=0 // pred_check
    _
  $region15: #{se_conv_forward.1} parent=0 // pred_check_branch
    %17 = sbr.rel (0) target = $region17
  $region16: #{se_conv_forward.1} parent=0 // pred_region
    _
  $region17: #{se_conv_forward.1} parent=0 // pred_fallthru
    _
  // Predicated region
  $region18: #{se_conv_forward.1} parent=0 // pred_check
    _
  $region19: #{se_conv_forward.1} parent=0 // pred_check_branch
    %19 = sbr.rel (0) target = $region21
  $region20: #{se_conv_forward.1} parent=0 // pred_region
    _
  $region21: #{se_conv_forward.1} parent=0 // pred_fallthru
    _
  %v21 = vld [vmem:[%s1] sm:$0x1]
  %v22 = vpack.c.bf16 %v21, %v21
  %v23 = vld [vmem:[%s2] sm:$0xff]
  %v24 = vld [vmem:[%s2 + $0x8] sm:$0xff]
  %v25 = vld [vmem:[%s2 + $0x10] sm:$0xff]
  %v26 = vld [vmem:[%s2 + $0x18] sm:$0xff]
  %v27 = vld [vmem:[%s2 + $0x20] sm:$0xf]
  %v28 = vld [vmem:[%s2 + $0x24] sm:$0xff]
  %v29 = vld [vmem:[%s2 + $0x2c] sm:$0xff]
  %v30 = vld [vmem:[%s2 + $0x34] sm:$0xff]
  %v31 = vld [vmem:[%s2 + $0x3c] sm:$0xff]
  %v32 = vld [vmem:[%s2 + $0x44] sm:$0xf]
  %v33 = vld [vmem:[%s2 + $0x48] sm:$0xff]
  %v34 = vld [vmem:[%s2 + $0x50] sm:$0xff]
  %v35 = vld [vmem:[%s2 + $0x58] sm:$0xff]
  %v36 = vld [vmem:[%s2 + $0x60] sm:$0xff]
  %v37 = vld [vmem:[%s2 + $0x68] sm:$0xf]
  %v38 = vld [vmem:[%s2 + $0x6c] sm:$0xff]
  %v39 = vld [vmem:[%s2 + $0x74] sm:$0xff]
  %v40 = vld [vmem:[%s2 + $0x7c] sm:$0xff]
  %v41 = vld [vmem:[%s2 + $0x84] sm:$0xff]
  %v42 = vld [vmem:[%s2 + $0x8c] sm:$0xf]
  %v43 = vld [vmem:[%s2 + $0x90] sm:$0xff]
  %v44 = vld [vmem:[%s2 + $0x98] sm:$0xff]
  %v45 = vld [vmem:[%s2 + $0xa0] sm:$0xff]
  %v46 = vld [vmem:[%s2 + $0xa8] sm:$0xff]
  %v47 = vld [vmem:[%s2 + $0xb0] sm:$0xf]
  %v48 = vld [vmem:[%s2 + $0xb4] sm:$0xff]
  %v49 = vld [vmem:[%s2 + $0xbc] sm:$0xff]
  %v50 = vld [vmem:[%s2 + $0xc4] sm:$0xff]
  %v51 = vld [vmem:[%s2 + $0xcc] sm:$0xff]
  %v52 = vld [vmem:[%s2 + $0xd4] sm:$0xf]
  %v53 = vld [vmem:[%s3] sm:$0xff]
  %v54 = vld [vmem:[%s3 + $0x8] sm:$0x1]
  %v85 = vunpack.c.l.b16 %v23
  %v86 = vunpack.c.h.b16 %v23
  %v87 = vunpack.c.l.b16 %v24
  %v88 = vunpack.c.h.b16 %v24
  %v89 = vunpack.c.l.b16 %v25
  %v90 = vunpack.c.h.b16 %v25
  %v91 = vunpack.c.l.b16 %v26
  %v92 = vunpack.c.h.b16 %v26
  %v93 = vunpack.c.l.b16 %v27
  %v94 = vunpack.c.l.b16 %v28
  %v95 = vunpack.c.h.b16 %v28
  %v96 = vunpack.c.l.b16 %v29
  %v97 = vunpack.c.h.b16 %v29
  %v98 = vunpack.c.l.b16 %v30
  %v99 = vunpack.c.h.b16 %v30
  %v100 = vunpack.c.l.b16 %v31
  %v101 = vunpack.c.h.b16 %v31
  %v102 = vunpack.c.l.b16 %v32
  %v103 = vunpack.c.l.b16 %v33
  %v104 = vunpack.c.h.b16 %v33
  %v105 = vunpack.c.l.b16 %v34
  %v106 = vunpack.c.h.b16 %v34
  %v107 = vunpack.c.l.b16 %v35
  %v108 = vunpack.c.h.b16 %v35
  %v109 = vunpack.c.l.b16 %v36
  %v110 = vunpack.c.h.b16 %v36
  %v111 = vunpack.c.l.b16 %v37
  %v112 = vunpack.c.l.b16 %v38
  %v113 = vunpack.c.h.b16 %v38
  %v114 = vunpack.c.l.b16 %v39
  %v115 = vunpack.c.h.b16 %v39
  %v116 = vunpack.c.l.b16 %v40
  %v117 = vunpack.c.h.b16 %v40
  %v118 = vunpack.c.l.b16 %v41
  %v119 = vunpack.c.h.b16 %v41
  %v120 = vunpack.c.l.b16 %v42
  %v121 = vunpack.c.l.b16 %v43
  %v122 = vunpack.c.h.b16 %v43
  %v123 = vunpack.c.l.b16 %v44
  %v124 = vunpack.c.h.b16 %v44
  %v125 = vunpack.c.l.b16 %v45
  %v126 = vunpack.c.h.b16 %v45
  %v127 = vunpack.c.l.b16 %v46
  %v128 = vunpack.c.h.b16 %v46
  %v129 = vunpack.c.l.b16 %v47
  %v130 = vunpack.c.l.b16 %v48
  %v131 = vunpack.c.h.b16 %v48
  %v132 = vunpack.c.l.b16 %v49
  %v133 = vunpack.c.h.b16 %v49
  %v134 = vunpack.c.l.b16 %v50
  %v135 = vunpack.c.h.b16 %v50
  %v136 = vunpack.c.l.b16 %v51
  %v137 = vunpack.c.h.b16 %v51
  %v138 = vunpack.c.l.b16 %v52
  %v139 = vpack.c.b16 %v94, %v85
  %v140 = vpack.c.b16 %v95, %v86
  %v141 = vpack.c.b16 %v96, %v87
  %v142 = vpack.c.b16 %v97, %v88
  %v143 = vpack.c.b16 %v98, %v89
  %v144 = vpack.c.b16 %v99, %v90
  %v145 = vpack.c.b16 %v100, %v91
  %v146 = vpack.c.b16 %v101, %v92
  %v147 = vpack.c.b16 %v102, %v93
  %v148 = vpack.c.b16 %v112, %v103
  %v149 = vpack.c.b16 %v113, %v104
  %v150 = vpack.c.b16 %v114, %v105
  %v151 = vpack.c.b16 %v115, %v106
  %v152 = vpack.c.b16 %v116, %v107
  %v153 = vpack.c.b16 %v117, %v108
  %v154 = vpack.c.b16 %v118, %v109
  %v155 = vpack.c.b16 %v119, %v110
  %v156 = vpack.c.b16 %v120, %v111
  %v157 = vpack.c.b16 %v130, %v121
  %v158 = vpack.c.b16 %v131, %v122
  %v159 = vpack.c.b16 %v132, %v123
  %v160 = vpack.c.b16 %v133, %v124
  %v161 = vpack.c.b16 %v134, %v125
  %v162 = vpack.c.b16 %v135, %v126
  %v163 = vpack.c.b16 %v136, %v127
  %v164 = vpack.c.b16 %v137, %v128
  %v165 = vpack.c.b16 %v138, %v129
  %v195 = vperm.slane %v53, 0
  %v196 = vperm.slane %v53, 1
  %v197 = vperm.slane %v53, 2
  %v198 = vperm.slane %v53, 3
  %v199 = vperm.slane %v53, 4
  %v200 = vperm.slane %v53, 5
  %v201 = vperm.slane %v53, 6
  %v202 = vperm.slane %v53, 7
  %v203 = vperm.slane %v54, 0
  %vm213 = vcmask 392192
  %v215 = vsel %vm213, %v22, 0
  %217 = vmatpush.bf16.msra.mxu0 0
  %218 = vmatpush.bf16.msra.mxu0 0
  %219 = vmatpush.bf16.msra.mxu0 0
  %220 = vmatpush.bf16.msra.mxu0 0
  %221 = vmatpush.bf16.msra.mxu0 0
  %222 = vmatpush.bf16.msra.mxu0 %v157
  %223 = vmatpush.bf16.msra.mxu0 %v148
  %224 = vmatpush.bf16.msra.mxu0 %v139
  %225 = vmatmul.bf16.gmra.mxu0 %v215
  %v226 = vpop.f32.mrf.mxu0
  %v227 = vadd.f32 %v195, %v226
  %v228 = vpop.f32.mrf.mxu0
  %229 = vdwg.mxu0
  %230 = vmatpush.bf16.msra.mxu0 0
  %231 = vmatpush.bf16.msra.mxu0 0
  %232 = vmatpush.bf16.msra.mxu0 0
  %233 = vmatpush.bf16.msra.mxu0 0
  %234 = vmatpush.bf16.msra.mxu0 0
  %235 = vmatpush.bf16.msra.mxu0 %v158
  %236 = vmatpush.bf16.msra.mxu0 %v149
  %237 = vmatpush.bf16.msra.mxu0 %v140
  %238 = vmatmul.bf16.gmra.mxu0 %v215
  %v239 = vpop.f32.mrf.mxu0
  %v240 = vadd.f32 %v196, %v239
  %v241 = vpop.f32.mrf.mxu0
  %242 = vdwg.mxu0
  %243 = vmatpush.bf16.msra.mxu0 0
  %244 = vmatpush.bf16.msra.mxu0 0
  %245 = vmatpush.bf16.msra.mxu0 0
  %246 = vmatpush.bf16.msra.mxu0 0
  %247 = vmatpush.bf16.msra.mxu0 0
  %248 = vmatpush.bf16.msra.mxu0 %v159
  %249 = vmatpush.bf16.msra.mxu0 %v150
  %250 = vmatpush.bf16.msra.mxu0 %v141
  %251 = vmatmul.bf16.gmra.mxu0 %v215
  %v252 = vpop.f32.mrf.mxu0
  %v253 = vadd.f32 %v197, %v252
  %v254 = vpop.f32.mrf.mxu0
  %255 = vdwg.mxu0
  %256 = vmatpush.bf16.msra.mxu0 0
  %257 = vmatpush.bf16.msra.mxu0 0
  %258 = vmatpush.bf16.msra.mxu0 0
  %259 = vmatpush.bf16.msra.mxu0 0
  %260 = vmatpush.bf16.msra.mxu0 0
  %261 = vmatpush.bf16.msra.mxu0 %v160
  %262 = vmatpush.bf16.msra.mxu0 %v151
  %263 = vmatpush.bf16.msra.mxu0 %v142
  %264 = vmatmul.bf16.gmra.mxu0 %v215
  %v265 = vpop.f32.mrf.mxu0
  %v266 = vadd.f32 %v198, %v265
  %v267 = vpop.f32.mrf.mxu0
  %268 = vdwg.mxu0
  %269 = vmatpush.bf16.msra.mxu0 0
  %270 = vmatpush.bf16.msra.mxu0 0
  %271 = vmatpush.bf16.msra.mxu0 0
  %272 = vmatpush.bf16.msra.mxu0 0
  %273 = vmatpush.bf16.msra.mxu0 0
  %274 = vmatpush.bf16.msra.mxu0 %v161
  %275 = vmatpush.bf16.msra.mxu0 %v152
  %276 = vmatpush.bf16.msra.mxu0 %v143
  %277 = vmatmul.bf16.gmra.mxu0 %v215
  %v278 = vpop.f32.mrf.mxu0
  %v279 = vadd.f32 %v199, %v278
  %v280 = vpop.f32.mrf.mxu0
  %281 = vdwg.mxu0
  %282 = vmatpush.bf16.msra.mxu0 0
  %283 = vmatpush.bf16.msra.mxu0 0
  %284 = vmatpush.bf16.msra.mxu0 0
  %285 = vmatpush.bf16.msra.mxu0 0
  %286 = vmatpush.bf16.msra.mxu0 0
  %287 = vmatpush.bf16.msra.mxu0 %v162
  %288 = vmatpush.bf16.msra.mxu0 %v153
  %289 = vmatpush.bf16.msra.mxu0 %v144
  %290 = vmatmul.bf16.gmra.mxu0 %v215
  %v291 = vpop.f32.mrf.mxu0
  %v292 = vadd.f32 %v200, %v291
  %v293 = vpop.f32.mrf.mxu0
  %294 = vdwg.mxu0
  %295 = vmatpush.bf16.msra.mxu0 0
  %296 = vmatpush.bf16.msra.mxu0 0
  %297 = vmatpush.bf16.msra.mxu0 0
  %298 = vmatpush.bf16.msra.mxu0 0
  %299 = vmatpush.bf16.msra.mxu0 0
  %300 = vmatpush.bf16.msra.mxu0 %v163
  %301 = vmatpush.bf16.msra.mxu0 %v154
  %302 = vmatpush.bf16.msra.mxu0 %v145
  %303 = vmatmul.bf16.gmra.mxu0 %v215
  %v304 = vpop.f32.mrf.mxu0
  %v305 = vadd.f32 %v201, %v304
  %v306 = vpop.f32.mrf.mxu0
  %307 = vdwg.mxu0
  %308 = vmatpush.bf16.msra.mxu0 0
  %309 = vmatpush.bf16.msra.mxu0 0
  %310 = vmatpush.bf16.msra.mxu0 0
  %311 = vmatpush.bf16.msra.mxu0 0
  %312 = vmatpush.bf16.msra.mxu0 0
  %313 = vmatpush.bf16.msra.mxu0 %v164
  %314 = vmatpush.bf16.msra.mxu0 %v155
  %315 = vmatpush.bf16.msra.mxu0 %v146
  %316 = vmatmul.bf16.gmra.mxu0 %v215
  %v317 = vpop.f32.mrf.mxu0
  %v318 = vadd.f32 %v202, %v317
  %v319 = vpop.f32.mrf.mxu0
  %320 = vdwg.mxu0
  %321 = vmatpush.bf16.msra.mxu0 0
  %322 = vmatpush.bf16.msra.mxu0 0
  %323 = vmatpush.bf16.msra.mxu0 0
  %324 = vmatpush.bf16.msra.mxu0 0
  %325 = vmatpush.bf16.msra.mxu0 0
  %326 = vmatpush.bf16.msra.mxu0 %v165
  %327 = vmatpush.bf16.msra.mxu0 %v156
  %328 = vmatpush.bf16.msra.mxu0 %v147
  %329 = vmatmul.bf16.gmra.mxu0 %v215
  %v330 = vpop.f32.mrf.mxu0
  %v331 = vadd.f32 %v203, %v330
  %v332 = vpop.f32.mrf.mxu0
  %333 = vdwg.mxu0
  %v334 = vxor.u32 %v227, 2147483648
  %v335 = vxor.u32 %v240, 2147483648
  %v336 = vxor.u32 %v253, 2147483648
  %v337 = vxor.u32 %v266, 2147483648
  %v338 = vxor.u32 %v279, 2147483648
  %v339 = vxor.u32 %v292, 2147483648
  %v340 = vxor.u32 %v305, 2147483648
  %v341 = vxor.u32 %v318, 2147483648
  %v342 = vxor.u32 %v331, 2147483648
  %v343 = vmul.f32 %v334, 1.442695
  %v344 = vpow.pop %v343
  %v345 = vmul.f32 %v335, 1.442695
  %v346 = vpow.pop %v345
  %v347 = vmul.f32 %v336, 1.442695
  %v348 = vpow.pop %v347
  %v349 = vmul.f32 %v337, 1.442695
  %v350 = vpow.pop %v349
  %v351 = vmul.f32 %v338, 1.442695
  %v352 = vpow.pop %v351
  %v353 = vmul.f32 %v339, 1.442695
  %v354 = vpow.pop %v353
  %v355 = vmul.f32 %v340, 1.442695
  %v356 = vpow.pop %v355
  %v357 = vmul.f32 %v341, 1.442695
  %v358 = vpow.pop %v357
  %v359 = vmul.f32 %v342, 1.442695
  %v360 = vpow.pop %v359
  %v361 = vadd.f32 %v344, 1.0
  %v362 = vadd.f32 %v346, 1.0
  %v363 = vadd.f32 %v348, 1.0
  %v364 = vadd.f32 %v350, 1.0
  %v365 = vadd.f32 %v352, 1.0
  %v366 = vadd.f32 %v354, 1.0
  %v367 = vadd.f32 %v356, 1.0
  %v368 = vadd.f32 %v358, 1.0
  %v369 = vadd.f32 %v360, 1.0
  %v370 = vrcp.pop %v361
  %v371 = vmul.f32 %v361, %v370
  %v372 = vsub.f32 1.0, %v371
  %v373 = vmul.f32 %v370, %v372
  %v374 = vadd.f32 %v370, %v373
  %vm375 = vweird.f32 %v361
  %vm376 = vweird.f32 %v370
  %vm377 = vmor %vm375, %vm376
  %v378 = vsel %vm377, %v370, %v374
  %v379 = vand.u32 2147483647, %v361
  %vm380 = vcmp.eq.f32.partialorder %v379, 8.507059e+37
  %v381 = vand.u32 %v361, 2147483648
  %v382 = vor.u32 1.1754944e-38, %v381
  %v383 = vsel %vm380, %v382, %v378
  %v384 = vmul.f32 1.0, %v383
  %v385 = vrcp.pop %v362
  %v386 = vmul.f32 %v362, %v385
  %v387 = vsub.f32 1.0, %v386
  %v388 = vmul.f32 %v385, %v387
  %v389 = vadd.f32 %v385, %v388
  %vm390 = vweird.f32 %v362
  %vm391 = vweird.f32 %v385
  %vm392 = vmor %vm390, %vm391
  %v393 = vsel %vm392, %v385, %v389
  %v394 = vand.u32 2147483647, %v362
  %vm395 = vcmp.eq.f32.partialorder %v394, 8.507059e+37
  %v396 = vand.u32 %v362, 2147483648
  %v397 = vor.u32 1.1754944e-38, %v396
  %v398 = vsel %vm395, %v397, %v393
  %v399 = vmul.f32 1.0, %v398
  %v400 = vrcp.pop %v363
  %v401 = vmul.f32 %v363, %v400
  %v402 = vsub.f32 1.0, %v401
  %v403 = vmul.f32 %v400, %v402
  %v404 = vadd.f32 %v400, %v403
  %vm405 = vweird.f32 %v363
  %vm406 = vweird.f32 %v400
  %vm407 = vmor %vm405, %vm406
  %v408 = vsel %vm407, %v400, %v404
  %v409 = vand.u32 2147483647, %v363
  %vm410 = vcmp.eq.f32.partialorder %v409, 8.507059e+37
  %v411 = vand.u32 %v363, 2147483648
  %v412 = vor.u32 1.1754944e-38, %v411
  %v413 = vsel %vm410, %v412, %v408
  %v414 = vmul.f32 1.0, %v413
  %v415 = vrcp.pop %v364
  %v416 = vmul.f32 %v364, %v415
  %v417 = vsub.f32 1.0, %v416
  %v418 = vmul.f32 %v415, %v417
  %v419 = vadd.f32 %v415, %v418
  %vm420 = vweird.f32 %v364
  %vm421 = vweird.f32 %v415
  %vm422 = vmor %vm420, %vm421
  %v423 = vsel %vm422, %v415, %v419
  %v424 = vand.u32 2147483647, %v364
  %vm425 = vcmp.eq.f32.partialorder %v424, 8.507059e+37
  %v426 = vand.u32 %v364, 2147483648
  %v427 = vor.u32 1.1754944e-38, %v426
  %v428 = vsel %vm425, %v427, %v423
  %v429 = vmul.f32 1.0, %v428
  %v430 = vrcp.pop %v365
  %v431 = vmul.f32 %v365, %v430
  %v432 = vsub.f32 1.0, %v431
  %v433 = vmul.f32 %v430, %v432
  %v434 = vadd.f32 %v430, %v433
  %vm435 = vweird.f32 %v365
  %vm436 = vweird.f32 %v430
  %vm437 = vmor %vm435, %vm436
  %v438 = vsel %vm437, %v430, %v434
  %v439 = vand.u32 2147483647, %v365
  %vm440 = vcmp.eq.f32.partialorder %v439, 8.507059e+37
  %v441 = vand.u32 %v365, 2147483648
  %v442 = vor.u32 1.1754944e-38, %v441
  %v443 = vsel %vm440, %v442, %v438
  %v444 = vmul.f32 1.0, %v443
  %v445 = vrcp.pop %v366
  %v446 = vmul.f32 %v366, %v445
  %v447 = vsub.f32 1.0, %v446
  %v448 = vmul.f32 %v445, %v447
  %v449 = vadd.f32 %v445, %v448
  %vm450 = vweird.f32 %v366
  %vm451 = vweird.f32 %v445
  %vm452 = vmor %vm450, %vm451
  %v453 = vsel %vm452, %v445, %v449
  %v454 = vand.u32 2147483647, %v366
  %vm455 = vcmp.eq.f32.partialorder %v454, 8.507059e+37
  %v456 = vand.u32 %v366, 2147483648
  %v457 = vor.u32 1.1754944e-38, %v456
  %v458 = vsel %vm455, %v457, %v453
  %v459 = vmul.f32 1.0, %v458
  %v460 = vrcp.pop %v367
  %v461 = vmul.f32 %v367, %v460
  %v462 = vsub.f32 1.0, %v461
  %v463 = vmul.f32 %v460, %v462
  %v464 = vadd.f32 %v460, %v463
  %vm465 = vweird.f32 %v367
  %vm466 = vweird.f32 %v460
  %vm467 = vmor %vm465, %vm466
  %v468 = vsel %vm467, %v460, %v464
  %v469 = vand.u32 2147483647, %v367
  %vm470 = vcmp.eq.f32.partialorder %v469, 8.507059e+37
  %v471 = vand.u32 %v367, 2147483648
  %v472 = vor.u32 1.1754944e-38, %v471
  %v473 = vsel %vm470, %v472, %v468
  %v474 = vmul.f32 1.0, %v473
  %v475 = vrcp.pop %v368
  %v476 = vmul.f32 %v368, %v475
  %v477 = vsub.f32 1.0, %v476
  %v478 = vmul.f32 %v475, %v477
  %v479 = vadd.f32 %v475, %v478
  %vm480 = vweird.f32 %v368
  %vm481 = vweird.f32 %v475
  %vm482 = vmor %vm480, %vm481
  %v483 = vsel %vm482, %v475, %v479
  %v484 = vand.u32 2147483647, %v368
  %vm485 = vcmp.eq.f32.partialorder %v484, 8.507059e+37
  %v486 = vand.u32 %v368, 2147483648
  %v487 = vor.u32 1.1754944e-38, %v486
  %v488 = vsel %vm485, %v487, %v483
  %v489 = vmul.f32 1.0, %v488
  %v490 = vrcp.pop %v369
  %v491 = vmul.f32 %v369, %v490
  %v492 = vsub.f32 1.0, %v491
  %v493 = vmul.f32 %v490, %v492
  %v494 = vadd.f32 %v490, %v493
  %vm495 = vweird.f32 %v369
  %vm496 = vweird.f32 %v490
  %vm497 = vmor %vm495, %vm496
  %v498 = vsel %vm497, %v490, %v494
  %v499 = vand.u32 2147483647, %v369
  %vm500 = vcmp.eq.f32.partialorder %v499, 8.507059e+37
  %v501 = vand.u32 %v369, 2147483648
  %v502 = vor.u32 1.1754944e-38, %v501
  %v503 = vsel %vm500, %v502, %v498
  %v504 = vmul.f32 1.0, %v503
  %v505 = vld [vmem:[%s4] sm:$0xff]
  %v506 = vld [vmem:[%s4 + $0x8] sm:$0xff]
  %v507 = vld [vmem:[%s4 + $0x10] sm:$0xff]
  %v508 = vld [vmem:[%s4 + $0x18] sm:$0xff]
  %v509 = vld [vmem:[%s4 + $0x20] sm:$0xf]
  %v510 = vld [vmem:[%s4 + $0x24] sm:$0xff]
  %v511 = vld [vmem:[%s4 + $0x2c] sm:$0xff]
  %v512 = vld [vmem:[%s4 + $0x34] sm:$0xff]
  %v513 = vld [vmem:[%s4 + $0x3c] sm:$0xff]
  %v514 = vld [vmem:[%s4 + $0x44] sm:$0xf]
  %v515 = vld [vmem:[%s4 + $0x48] sm:$0xff]
  %v516 = vld [vmem:[%s4 + $0x50] sm:$0xff]
  %v517 = vld [vmem:[%s4 + $0x58] sm:$0xff]
  %v518 = vld [vmem:[%s4 + $0x60] sm:$0xff]
  %v519 = vld [vmem:[%s4 + $0x68] sm:$0xf]
  %v520 = vld [vmem:[%s4 + $0x6c] sm:$0xff]
  %v521 = vld [vmem:[%s4 + $0x74] sm:$0xff]
  %v522 = vld [vmem:[%s4 + $0x7c] sm:$0xff]
  %v523 = vld [vmem:[%s4 + $0x84] sm:$0xff]
  %v524 = vld [vmem:[%s4 + $0x8c] sm:$0xf]
  %v525 = vld [vmem:[%s4 + $0x90] sm:$0xff]
  %v526 = vld [vmem:[%s4 + $0x98] sm:$0xff]
  %v527 = vld [vmem:[%s4 + $0xa0] sm:$0xff]
  %v528 = vld [vmem:[%s4 + $0xa8] sm:$0xff]
  %v529 = vld [vmem:[%s4 + $0xb0] sm:$0xf]
  %v530 = vld [vmem:[%s4 + $0xb4] sm:$0xff]
  %v531 = vld [vmem:[%s4 + $0xbc] sm:$0xff]
  %v532 = vld [vmem:[%s4 + $0xc4] sm:$0xff]
  %v533 = vld [vmem:[%s4 + $0xcc] sm:$0xff]
  %v534 = vld [vmem:[%s4 + $0xd4] sm:$0xf]
  %v535 = vld [vmem:[%s4 + $0xd8] sm:$0xff]
  %v536 = vld [vmem:[%s4 + $0xe0] sm:$0xff]
  %v537 = vld [vmem:[%s4 + $0xe8] sm:$0xff]
  %v538 = vld [vmem:[%s4 + $0xf0] sm:$0xff]
  %v539 = vld [vmem:[%s4 + $0xf8] sm:$0xf]
  %v540 = vld [vmem:[%s4 + $0xfc] sm:$0xff]
  %v541 = vld [vmem:[%s4 + $0x104] sm:$0xff]
  %v542 = vld [vmem:[%s4 + $0x10c] sm:$0xff]
  %v543 = vld [vmem:[%s4 + $0x114] sm:$0xff]
  %v544 = vld [vmem:[%s4 + $0x11c] sm:$0xf]
  %v545 = vld [vmem:[%s4 + $0x120] sm:$0xff]
  %v546 = vld [vmem:[%s4 + $0x128] sm:$0xff]
  %v547 = vld [vmem:[%s4 + $0x130] sm:$0xff]
  %v548 = vld [vmem:[%s4 + $0x138] sm:$0xff]
  %v549 = vld [vmem:[%s4 + $0x140] sm:$0xf]
  %v550 = vld [vmem:[%s4 + $0x144] sm:$0xff]
  %v551 = vld [vmem:[%s4 + $0x14c] sm:$0xff]
  %v552 = vld [vmem:[%s4 + $0x154] sm:$0xff]
  %v553 = vld [vmem:[%s4 + $0x15c] sm:$0xff]
  %v554 = vld [vmem:[%s4 + $0x164] sm:$0xf]
  %v555 = vld [vmem:[%s4 + $0x168] sm:$0xff]
  %v556 = vld [vmem:[%s4 + $0x170] sm:$0xff]
  %v557 = vld [vmem:[%s4 + $0x178] sm:$0xff]
  %v558 = vld [vmem:[%s4 + $0x180] sm:$0xff]
  %v559 = vld [vmem:[%s4 + $0x188] sm:$0xf]
  %v560 = vld [vmem:[%s4 + $0x18c] sm:$0xff]
  %v561 = vld [vmem:[%s4 + $0x194] sm:$0xff]
  %v562 = vld [vmem:[%s4 + $0x19c] sm:$0xff]
  %v563 = vld [vmem:[%s4 + $0x1a4] sm:$0xff]
  %v564 = vld [vmem:[%s4 + $0x1ac] sm:$0xf]
  %v565 = vld [vmem:[%s4 + $0x1b0] sm:$0xff]
  %v566 = vld [vmem:[%s4 + $0x1b8] sm:$0xff]
  %v567 = vld [vmem:[%s4 + $0x1c0] sm:$0xff]
  %v568 = vld [vmem:[%s4 + $0x1c8] sm:$0xff]
  %v569 = vld [vmem:[%s4 + $0x1d0] sm:$0xf]
  %v570 = vld [vmem:[%s4 + $0x1d4] sm:$0xff]
  %v571 = vld [vmem:[%s4 + $0x1dc] sm:$0xff]
  %v572 = vld [vmem:[%s4 + $0x1e4] sm:$0xff]
  %v573 = vld [vmem:[%s4 + $0x1ec] sm:$0xff]
  %v574 = vld [vmem:[%s4 + $0x1f4] sm:$0xf]
  %v575 = vld [vmem:[%s4 + $0x1f8] sm:$0xff]
  %v576 = vld [vmem:[%s4 + $0x200] sm:$0xff]
  %v577 = vld [vmem:[%s4 + $0x208] sm:$0xff]
  %v578 = vld [vmem:[%s4 + $0x210] sm:$0xff]
  %v579 = vld [vmem:[%s4 + $0x218] sm:$0xf]
  %v580 = vld [vmem:[%s4 + $0x21c] sm:$0xff]
  %v581 = vld [vmem:[%s4 + $0x224] sm:$0xff]
  %v582 = vld [vmem:[%s4 + $0x22c] sm:$0xff]
  %v583 = vld [vmem:[%s4 + $0x234] sm:$0xff]
  %v584 = vld [vmem:[%s4 + $0x23c] sm:$0xf]
  %v585 = vld [vmem:[%s4 + $0x240] sm:$0xff]
  %v586 = vld [vmem:[%s4 + $0x248] sm:$0xff]
  %v587 = vld [vmem:[%s4 + $0x250] sm:$0xff]
  %v588 = vld [vmem:[%s4 + $0x258] sm:$0xff]
  %v589 = vld [vmem:[%s4 + $0x260] sm:$0xf]
  %v590 = vld [vmem:[%s4 + $0x264] sm:$0xff]
  %v591 = vld [vmem:[%s4 + $0x26c] sm:$0xff]
  %v592 = vld [vmem:[%s4 + $0x274] sm:$0xff]
  %v593 = vld [vmem:[%s4 + $0x27c] sm:$0xff]
  %v594 = vld [vmem:[%s4 + $0x284] sm:$0xf]
  %v595 = vld [vmem:[%s4 + $0x288] sm:$0xff]
  %v596 = vld [vmem:[%s4 + $0x290] sm:$0xff]
  %v597 = vld [vmem:[%s4 + $0x298] sm:$0xff]
  %v598 = vld [vmem:[%s4 + $0x2a0] sm:$0xff]
  %v599 = vld [vmem:[%s4 + $0x2a8] sm:$0xf]
  %v600 = vld [vmem:[%s4 + $0x2ac] sm:$0xff]
  %v601 = vld [vmem:[%s4 + $0x2b4] sm:$0xff]
  %v602 = vld [vmem:[%s4 + $0x2bc] sm:$0xff]
  %v603 = vld [vmem:[%s4 + $0x2c4] sm:$0xff]
  %v604 = vld [vmem:[%s4 + $0x2cc] sm:$0xf]
  %v605 = vld [vmem:[%s4 + $0x2d0] sm:$0xff]
  %v606 = vld [vmem:[%s4 + $0x2d8] sm:$0xff]
  %v607 = vld [vmem:[%s4 + $0x2e0] sm:$0xff]
  %v608 = vld [vmem:[%s4 + $0x2e8] sm:$0xff]
  %v609 = vld [vmem:[%s4 + $0x2f0] sm:$0xf]
  %v610 = vld [vmem:[%s4 + $0x2f4] sm:$0xff]
  %v611 = vld [vmem:[%s4 + $0x2fc] sm:$0xff]
  %v612 = vld [vmem:[%s4 + $0x304] sm:$0xff]
  %v613 = vld [vmem:[%s4 + $0x30c] sm:$0xff]
  %v614 = vld [vmem:[%s4 + $0x314] sm:$0xf]
  %v615 = vld [vmem:[%s4 + $0x318] sm:$0xff]
  %v616 = vld [vmem:[%s4 + $0x320] sm:$0xff]
  %v617 = vld [vmem:[%s4 + $0x328] sm:$0xff]
  %v618 = vld [vmem:[%s4 + $0x330] sm:$0xff]
  %v619 = vld [vmem:[%s4 + $0x338] sm:$0xf]
  %v620 = vld [vmem:[%s4 + $0x33c] sm:$0xff]
  %v621 = vld [vmem:[%s4 + $0x344] sm:$0xff]
  %v622 = vld [vmem:[%s4 + $0x34c] sm:$0xff]
  %v623 = vld [vmem:[%s4 + $0x354] sm:$0xff]
  %v624 = vld [vmem:[%s4 + $0x35c] sm:$0xf]
  %v625 = vunpack.c.l.bf16 %v505
  %v626 = vunpack.c.h.bf16 %v505
  %v627 = vunpack.c.l.bf16 %v506
  %v628 = vunpack.c.h.bf16 %v506
  %v629 = vunpack.c.l.bf16 %v507
  %v630 = vunpack.c.h.bf16 %v507
  %v631 = vunpack.c.l.bf16 %v508
  %v632 = vunpack.c.h.bf16 %v508
  %v633 = vunpack.c.l.bf16 %v509
  %v634 = vunpack.c.l.bf16 %v510
  %v635 = vunpack.c.h.bf16 %v510
  %v636 = vunpack.c.l.bf16 %v511
  %v637 = vunpack.c.h.bf16 %v511
  %v638 = vunpack.c.l.bf16 %v512
  %v639 = vunpack.c.h.bf16 %v512
  %v640 = vunpack.c.l.bf16 %v513
  %v641 = vunpack.c.h.bf16 %v513
  %v642 = vunpack.c.l.bf16 %v514
  %v643 = vunpack.c.l.bf16 %v515
  %v644 = vunpack.c.h.bf16 %v515
  %v645 = vunpack.c.l.bf16 %v516
  %v646 = vunpack.c.h.bf16 %v516
  %v647 = vunpack.c.l.bf16 %v517
  %v648 = vunpack.c.h.bf16 %v517
  %v649 = vunpack.c.l.bf16 %v518
  %v650 = vunpack.c.h.bf16 %v518
  %v651 = vunpack.c.l.bf16 %v519
  %v652 = vunpack.c.l.bf16 %v520
  %v653 = vunpack.c.h.bf16 %v520
  %v654 = vunpack.c.l.bf16 %v521
  %v655 = vunpack.c.h.bf16 %v521
  %v656 = vunpack.c.l.bf16 %v522
  %v657 = vunpack.c.h.bf16 %v522
  %v658 = vunpack.c.l.bf16 %v523
  %v659 = vunpack.c.h.bf16 %v523
  %v660 = vunpack.c.l.bf16 %v524
  %v661 = vunpack.c.l.bf16 %v525
  %v662 = vunpack.c.h.bf16 %v525
  %v663 = vunpack.c.l.bf16 %v526
  %v664 = vunpack.c.h.bf16 %v526
  %v665 = vunpack.c.l.bf16 %v527
  %v666 = vunpack.c.h.bf16 %v527
  %v667 = vunpack.c.l.bf16 %v528
  %v668 = vunpack.c.h.bf16 %v528
  %v669 = vunpack.c.l.bf16 %v529
  %v670 = vunpack.c.l.bf16 %v530
  %v671 = vunpack.c.h.bf16 %v530
  %v672 = vunpack.c.l.bf16 %v531
  %v673 = vunpack.c.h.bf16 %v531
  %v674 = vunpack.c.l.bf16 %v532
  %v675 = vunpack.c.h.bf16 %v532
  %v676 = vunpack.c.l.bf16 %v533
  %v677 = vunpack.c.h.bf16 %v533
  %v678 = vunpack.c.l.bf16 %v534
  %v679 = vunpack.c.l.bf16 %v535
  %v680 = vunpack.c.h.bf16 %v535
  %v681 = vunpack.c.l.bf16 %v536
  %v682 = vunpack.c.h.bf16 %v536
  %v683 = vunpack.c.l.bf16 %v537
  %v684 = vunpack.c.h.bf16 %v537
  %v685 = vunpack.c.l.bf16 %v538
  %v686 = vunpack.c.h.bf16 %v538
  %v687 = vunpack.c.l.bf16 %v539
  %v688 = vunpack.c.l.bf16 %v540
  %v689 = vunpack.c.h.bf16 %v540
  %v690 = vunpack.c.l.bf16 %v541
  %v691 = vunpack.c.h.bf16 %v541
  %v692 = vunpack.c.l.bf16 %v542
  %v693 = vunpack.c.h.bf16 %v542
  %v694 = vunpack.c.l.bf16 %v543
  %v695 = vunpack.c.h.bf16 %v543
  %v696 = vunpack.c.l.bf16 %v544
  %v697 = vunpack.c.l.bf16 %v545
  %v698 = vunpack.c.h.bf16 %v545
  %v699 = vunpack.c.l.bf16 %v546
  %v700 = vunpack.c.h.bf16 %v546
  %v701 = vunpack.c.l.bf16 %v547
  %v702 = vunpack.c.h.bf16 %v547
  %v703 = vunpack.c.l.bf16 %v548
  %v704 = vunpack.c.h.bf16 %v548
  %v705 = vunpack.c.l.bf16 %v549
  %v706 = vunpack.c.l.bf16 %v550
  %v707 = vunpack.c.h.bf16 %v550
  %v708 = vunpack.c.l.bf16 %v551
  %v709 = vunpack.c.h.bf16 %v551
  %v710 = vunpack.c.l.bf16 %v552
  %v711 = vunpack.c.h.bf16 %v552
  %v712 = vunpack.c.l.bf16 %v553
  %v713 = vunpack.c.h.bf16 %v553
  %v714 = vunpack.c.l.bf16 %v554
  %v715 = vunpack.c.l.bf16 %v555
  %v716 = vunpack.c.h.bf16 %v555
  %v717 = vunpack.c.l.bf16 %v556
  %v718 = vunpack.c.h.bf16 %v556
  %v719 = vunpack.c.l.bf16 %v557
  %v720 = vunpack.c.h.bf16 %v557
  %v721 = vunpack.c.l.bf16 %v558
  %v722 = vunpack.c.h.bf16 %v558
  %v723 = vunpack.c.l.bf16 %v559
  %v724 = vunpack.c.l.bf16 %v560
  %v725 = vunpack.c.h.bf16 %v560
  %v726 = vunpack.c.l.bf16 %v561
  %v727 = vunpack.c.h.bf16 %v561
  %v728 = vunpack.c.l.bf16 %v562
  %v729 = vunpack.c.h.bf16 %v562
  %v730 = vunpack.c.l.bf16 %v563
  %v731 = vunpack.c.h.bf16 %v563
  %v732 = vunpack.c.l.bf16 %v564
  %v733 = vunpack.c.l.bf16 %v565
  %v734 = vunpack.c.h.bf16 %v565
  %v735 = vunpack.c.l.bf16 %v566
  %v736 = vunpack.c.h.bf16 %v566
  %v737 = vunpack.c.l.bf16 %v567
  %v738 = vunpack.c.h.bf16 %v567
  %v739 = vunpack.c.l.bf16 %v568
  %v740 = vunpack.c.h.bf16 %v568
  %v741 = vunpack.c.l.bf16 %v569
  %v742 = vunpack.c.l.bf16 %v570
  %v743 = vunpack.c.h.bf16 %v570
  %v744 = vunpack.c.l.bf16 %v571
  %v745 = vunpack.c.h.bf16 %v571
  %v746 = vunpack.c.l.bf16 %v572
  %v747 = vunpack.c.h.bf16 %v572
  %v748 = vunpack.c.l.bf16 %v573
  %v749 = vunpack.c.h.bf16 %v573
  %v750 = vunpack.c.l.bf16 %v574
  %v751 = vunpack.c.l.bf16 %v575
  %v752 = vunpack.c.h.bf16 %v575
  %v753 = vunpack.c.l.bf16 %v576
  %v754 = vunpack.c.h.bf16 %v576
  %v755 = vunpack.c.l.bf16 %v577
  %v756 = vunpack.c.h.bf16 %v577
  %v757 = vunpack.c.l.bf16 %v578
  %v758 = vunpack.c.h.bf16 %v578
  %v759 = vunpack.c.l.bf16 %v579
  %v760 = vunpack.c.l.bf16 %v580
  %v761 = vunpack.c.h.bf16 %v580
  %v762 = vunpack.c.l.bf16 %v581
  %v763 = vunpack.c.h.bf16 %v581
  %v764 = vunpack.c.l.bf16 %v582
  %v765 = vunpack.c.h.bf16 %v582
  %v766 = vunpack.c.l.bf16 %v583
  %v767 = vunpack.c.h.bf16 %v583
  %v768 = vunpack.c.l.bf16 %v584
  %v769 = vunpack.c.l.bf16 %v585
  %v770 = vunpack.c.h.bf16 %v585
  %v771 = vunpack.c.l.bf16 %v586
  %v772 = vunpack.c.h.bf16 %v586
  %v773 = vunpack.c.l.bf16 %v587
  %v774 = vunpack.c.h.bf16 %v587
  %v775 = vunpack.c.l.bf16 %v588
  %v776 = vunpack.c.h.bf16 %v588
  %v777 = vunpack.c.l.bf16 %v589
  %v778 = vunpack.c.l.bf16 %v590
  %v779 = vunpack.c.h.bf16 %v590
  %v780 = vunpack.c.l.bf16 %v591
  %v781 = vunpack.c.h.bf16 %v591
  %v782 = vunpack.c.l.bf16 %v592
  %v783 = vunpack.c.h.bf16 %v592
  %v784 = vunpack.c.l.bf16 %v593
  %v785 = vunpack.c.h.bf16 %v593
  %v786 = vunpack.c.l.bf16 %v594
  %v787 = vunpack.c.l.bf16 %v595
  %v788 = vunpack.c.h.bf16 %v595
  %v789 = vunpack.c.l.bf16 %v596
  %v790 = vunpack.c.h.bf16 %v596
  %v791 = vunpack.c.l.bf16 %v597
  %v792 = vunpack.c.h.bf16 %v597
  %v793 = vunpack.c.l.bf16 %v598
  %v794 = vunpack.c.h.bf16 %v598
  %v795 = vunpack.c.l.bf16 %v599
  %v796 = vunpack.c.l.bf16 %v600
  %v797 = vunpack.c.h.bf16 %v600
  %v798 = vunpack.c.l.bf16 %v601
  %v799 = vunpack.c.h.bf16 %v601
  %v800 = vunpack.c.l.bf16 %v602
  %v801 = vunpack.c.h.bf16 %v602
  %v802 = vunpack.c.l.bf16 %v603
  %v803 = vunpack.c.h.bf16 %v603
  %v804 = vunpack.c.l.bf16 %v604
  %v805 = vunpack.c.l.bf16 %v605
  %v806 = vunpack.c.h.bf16 %v605
  %v807 = vunpack.c.l.bf16 %v606
  %v808 = vunpack.c.h.bf16 %v606
  %v809 = vunpack.c.l.bf16 %v607
  %v810 = vunpack.c.h.bf16 %v607
  %v811 = vunpack.c.l.bf16 %v608
  %v812 = vunpack.c.h.bf16 %v608
  %v813 = vunpack.c.l.bf16 %v609
  %v814 = vunpack.c.l.bf16 %v610
  %v815 = vunpack.c.h.bf16 %v610
  %v816 = vunpack.c.l.bf16 %v611
  %v817 = vunpack.c.h.bf16 %v611
  %v818 = vunpack.c.l.bf16 %v612
  %v819 = vunpack.c.h.bf16 %v612
  %v820 = vunpack.c.l.bf16 %v613
  %v821 = vunpack.c.h.bf16 %v613
  %v822 = vunpack.c.l.bf16 %v614
  %v823 = vunpack.c.l.bf16 %v615
  %v824 = vunpack.c.h.bf16 %v615
  %v825 = vunpack.c.l.bf16 %v616
  %v826 = vunpack.c.h.bf16 %v616
  %v827 = vunpack.c.l.bf16 %v617
  %v828 = vunpack.c.h.bf16 %v617
  %v829 = vunpack.c.l.bf16 %v618
  %v830 = vunpack.c.h.bf16 %v618
  %v831 = vunpack.c.l.bf16 %v619
  %v832 = vunpack.c.l.bf16 %v620
  %v833 = vunpack.c.h.bf16 %v620
  %v834 = vunpack.c.l.bf16 %v621
  %v835 = vunpack.c.h.bf16 %v621
  %v836 = vunpack.c.l.bf16 %v622
  %v837 = vunpack.c.h.bf16 %v622
  %v838 = vunpack.c.l.bf16 %v623
  %v839 = vunpack.c.h.bf16 %v623
  %v840 = vunpack.c.l.bf16 %v624
  %v841 = vperm.slane %v384, 0
  %v842 = vperm.slane %v399, 0
  %v843 = vperm.slane %v414, 0
  %v844 = vperm.slane %v429, 0
  %v845 = vperm.slane %v444, 0
  %v846 = vperm.slane %v459, 0
  %v847 = vperm.slane %v474, 0
  %v848 = vperm.slane %v489, 0
  %v849 = vperm.slane %v504, 0
  %v850 = vmul.f32 %v625, %v841
  %v851 = vmul.f32 %v626, %v842
  %v852 = vmul.f32 %v627, %v843
  %v853 = vmul.f32 %v628, %v844
  %v854 = vmul.f32 %v629, %v845
  %v855 = vmul.f32 %v630, %v846
  %v856 = vmul.f32 %v631, %v847
  %v857 = vmul.f32 %v632, %v848
  %v858 = vmul.f32 %v633, %v849
  %v859 = vmul.f32 %v634, %v841
  %v860 = vmul.f32 %v635, %v842
  %v861 = vmul.f32 %v636, %v843
  %v862 = vmul.f32 %v637, %v844
  %v863 = vmul.f32 %v638, %v845
  %v864 = vmul.f32 %v639, %v846
  %v865 = vmul.f32 %v640, %v847
  %v866 = vmul.f32 %v641, %v848
  %v867 = vmul.f32 %v642, %v849
  %v868 = vmul.f32 %v643, %v841
  %v869 = vmul.f32 %v644, %v842
  %v870 = vmul.f32 %v645, %v843
  %v871 = vmul.f32 %v646, %v844
  %v872 = vmul.f32 %v647, %v845
  %v873 = vmul.f32 %v648, %v846
  %v874 = vmul.f32 %v649, %v847
  %v875 = vmul.f32 %v650, %v848
  %v876 = vmul.f32 %v651, %v849
  %v877 = vmul.f32 %v652, %v841
  %v878 = vmul.f32 %v653, %v842
  %v879 = vmul.f32 %v654, %v843
  %v880 = vmul.f32 %v655, %v844
  %v881 = vmul.f32 %v656, %v845
  %v882 = vmul.f32 %v657, %v846
  %v883 = vmul.f32 %v658, %v847
  %v884 = vmul.f32 %v659, %v848
  %v885 = vmul.f32 %v660, %v849
  %v886 = vmul.f32 %v661, %v841
  %v887 = vmul.f32 %v662, %v842
  %v888 = vmul.f32 %v663, %v843
  %v889 = vmul.f32 %v664, %v844
  %v890 = vmul.f32 %v665, %v845
  %v891 = vmul.f32 %v666, %v846
  %v892 = vmul.f32 %v667, %v847
  %v893 = vmul.f32 %v668, %v848
  %v894 = vmul.f32 %v669, %v849
  %v895 = vmul.f32 %v670, %v841
  %v896 = vmul.f32 %v671, %v842
  %v897 = vmul.f32 %v672, %v843
  %v898 = vmul.f32 %v673, %v844
  %v899 = vmul.f32 %v674, %v845
  %v900 = vmul.f32 %v675, %v846
  %v901 = vmul.f32 %v676, %v847
  %v902 = vmul.f32 %v677, %v848
  %v903 = vmul.f32 %v678, %v849
  %v904 = vmul.f32 %v679, %v841
  %v905 = vmul.f32 %v680, %v842
  %v906 = vmul.f32 %v681, %v843
  %v907 = vmul.f32 %v682, %v844
  %v908 = vmul.f32 %v683, %v845
  %v909 = vmul.f32 %v684, %v846
  %v910 = vmul.f32 %v685, %v847
  %v911 = vmul.f32 %v686, %v848
  %v912 = vmul.f32 %v687, %v849
  %v913 = vmul.f32 %v688, %v841
  %v914 = vmul.f32 %v689, %v842
  %v915 = vmul.f32 %v690, %v843
  %v916 = vmul.f32 %v691, %v844
  %v917 = vmul.f32 %v692, %v845
  %v918 = vmul.f32 %v693, %v846
  %v919 = vmul.f32 %v694, %v847
  %v920 = vmul.f32 %v695, %v848
  %v921 = vmul.f32 %v696, %v849
  %v922 = vmul.f32 %v697, %v841
  %v923 = vmul.f32 %v698, %v842
  %v924 = vmul.f32 %v699, %v843
  %v925 = vmul.f32 %v700, %v844
  %v926 = vmul.f32 %v701, %v845
  %v927 = vmul.f32 %v702, %v846
  %v928 = vmul.f32 %v703, %v847
  %v929 = vmul.f32 %v704, %v848
  %v930 = vmul.f32 %v705, %v849
  %v931 = vmul.f32 %v706, %v841
  %v932 = vmul.f32 %v707, %v842
  %v933 = vmul.f32 %v708, %v843
  %v934 = vmul.f32 %v709, %v844
  %v935 = vmul.f32 %v710, %v845
  %v936 = vmul.f32 %v711, %v846
  %v937 = vmul.f32 %v712, %v847
  %v938 = vmul.f32 %v713, %v848
  %v939 = vmul.f32 %v714, %v849
  %v940 = vmul.f32 %v715, %v841
  %v941 = vmul.f32 %v716, %v842
  %v942 = vmul.f32 %v717, %v843
  %v943 = vmul.f32 %v718, %v844
  %v944 = vmul.f32 %v719, %v845
  %v945 = vmul.f32 %v720, %v846
  %v946 = vmul.f32 %v721, %v847
  %v947 = vmul.f32 %v722, %v848
  %v948 = vmul.f32 %v723, %v849
  %v949 = vmul.f32 %v724, %v841
  %v950 = vmul.f32 %v725, %v842
  %v951 = vmul.f32 %v726, %v843
  %v952 = vmul.f32 %v727, %v844
  %v953 = vmul.f32 %v728, %v845
  %v954 = vmul.f32 %v729, %v846
  %v955 = vmul.f32 %v730, %v847
  %v956 = vmul.f32 %v731, %v848
  %v957 = vmul.f32 %v732, %v849
  %v958 = vmul.f32 %v733, %v841
  %v959 = vmul.f32 %v734, %v842
  %v960 = vmul.f32 %v735, %v843
  %v961 = vmul.f32 %v736, %v844
  %v962 = vmul.f32 %v737, %v845
  %v963 = vmul.f32 %v738, %v846
  %v964 = vmul.f32 %v739, %v847
  %v965 = vmul.f32 %v740, %v848
  %v966 = vmul.f32 %v741, %v849
  %v967 = vmul.f32 %v742, %v841
  %v968 = vmul.f32 %v743, %v842
  %v969 = vmul.f32 %v744, %v843
  %v970 = vmul.f32 %v745, %v844
  %v971 = vmul.f32 %v746, %v845
  %v972 = vmul.f32 %v747, %v846
  %v973 = vmul.f32 %v748, %v847
  %v974 = vmul.f32 %v749, %v848
  %v975 = vmul.f32 %v750, %v849
  %v976 = vmul.f32 %v751, %v841
  %v977 = vmul.f32 %v752, %v842
  %v978 = vmul.f32 %v753, %v843
  %v979 = vmul.f32 %v754, %v844
  %v980 = vmul.f32 %v755, %v845
  %v981 = vmul.f32 %v756, %v846
  %v982 = vmul.f32 %v757, %v847
  %v983 = vmul.f32 %v758, %v848
  %v984 = vmul.f32 %v759, %v849
  %v985 = vmul.f32 %v760, %v841
  %v986 = vmul.f32 %v761, %v842
  %v987 = vmul.f32 %v762, %v843
  %v988 = vmul.f32 %v763, %v844
  %v989 = vmul.f32 %v764, %v845
  %v990 = vmul.f32 %v765, %v846
  %v991 = vmul.f32 %v766, %v847
  %v992 = vmul.f32 %v767, %v848
  %v993 = vmul.f32 %v768, %v849
  %v994 = vmul.f32 %v769, %v841
  %v995 = vmul.f32 %v770, %v842
  %v996 = vmul.f32 %v771, %v843
  %v997 = vmul.f32 %v772, %v844
  %v998 = vmul.f32 %v773, %v845
  %v999 = vmul.f32 %v774, %v846
  %v1000 = vmul.f32 %v775, %v847
  %v1001 = vmul.f32 %v776, %v848
  %v1002 = vmul.f32 %v777, %v849
  %v1003 = vmul.f32 %v778, %v841
  %v1004 = vmul.f32 %v779, %v842
  %v1005 = vmul.f32 %v780, %v843
  %v1006 = vmul.f32 %v781, %v844
  %v1007 = vmul.f32 %v782, %v845
  %v1008 = vmul.f32 %v783, %v846
  %v1009 = vmul.f32 %v784, %v847
  %v1010 = vmul.f32 %v785, %v848
  %v1011 = vmul.f32 %v786, %v849
  %v1012 = vmul.f32 %v787, %v841
  %v1013 = vmul.f32 %v788, %v842
  %v1014 = vmul.f32 %v789, %v843
  %v1015 = vmul.f32 %v790, %v844
  %v1016 = vmul.f32 %v791, %v845
  %v1017 = vmul.f32 %v792, %v846
  %v1018 = vmul.f32 %v793, %v847
  %v1019 = vmul.f32 %v794, %v848
  %v1020 = vmul.f32 %v795, %v849
  %v1021 = vmul.f32 %v796, %v841
  %v1022 = vmul.f32 %v797, %v842
  %v1023 = vmul.f32 %v798, %v843
  %v1024 = vmul.f32 %v799, %v844
  %v1025 = vmul.f32 %v800, %v845
  %v1026 = vmul.f32 %v801, %v846
  %v1027 = vmul.f32 %v802, %v847
  %v1028 = vmul.f32 %v803, %v848
  %v1029 = vmul.f32 %v804, %v849
  %v1030 = vmul.f32 %v805, %v841
  %v1031 = vmul.f32 %v806, %v842
  %v1032 = vmul.f32 %v807, %v843
  %v1033 = vmul.f32 %v808, %v844
  %v1034 = vmul.f32 %v809, %v845
  %v1035 = vmul.f32 %v810, %v846
  %v1036 = vmul.f32 %v811, %v847
  %v1037 = vmul.f32 %v812, %v848
  %v1038 = vmul.f32 %v813, %v849
  %v1039 = vmul.f32 %v814, %v841
  %v1040 = vmul.f32 %v815, %v842
  %v1041 = vmul.f32 %v816, %v843
  %v1042 = vmul.f32 %v817, %v844
  %v1043 = vmul.f32 %v818, %v845
  %v1044 = vmul.f32 %v819, %v846
  %v1045 = vmul.f32 %v820, %v847
  %v1046 = vmul.f32 %v821, %v848
  %v1047 = vmul.f32 %v822, %v849
  %v1048 = vmul.f32 %v823, %v841
  %v1049 = vmul.f32 %v824, %v842
  %v1050 = vmul.f32 %v825, %v843
  %v1051 = vmul.f32 %v826, %v844
  %v1052 = vmul.f32 %v827, %v845
  %v1053 = vmul.f32 %v828, %v846
  %v1054 = vmul.f32 %v829, %v847
  %v1055 = vmul.f32 %v830, %v848
  %v1056 = vmul.f32 %v831, %v849
  %v1057 = vmul.f32 %v832, %v841
  %v1058 = vmul.f32 %v833, %v842
  %v1059 = vmul.f32 %v834, %v843
  %v1060 = vmul.f32 %v835, %v844
  %v1061 = vmul.f32 %v836, %v845
  %v1062 = vmul.f32 %v837, %v846
  %v1063 = vmul.f32 %v838, %v847
  %v1064 = vmul.f32 %v839, %v848
  %v1065 = vmul.f32 %v840, %v849
  %v1066 = vpack.c.bf16 %v859, %v850
  %v1067 = vpack.c.bf16 %v860, %v851
  %v1068 = vpack.c.bf16 %v861, %v852
  %v1069 = vpack.c.bf16 %v862, %v853
  %v1070 = vpack.c.bf16 %v863, %v854
  %v1071 = vpack.c.bf16 %v864, %v855
  %v1072 = vpack.c.bf16 %v865, %v856
  %v1073 = vpack.c.bf16 %v866, %v857
  %v1074 = vpack.c.bf16 %v867, %v858
  %v1075 = vpack.c.bf16 %v877, %v868
  %v1076 = vpack.c.bf16 %v878, %v869
  %v1077 = vpack.c.bf16 %v879, %v870
  %v1078 = vpack.c.bf16 %v880, %v871
  %v1079 = vpack.c.bf16 %v881, %v872
  %v1080 = vpack.c.bf16 %v882, %v873
  %v1081 = vpack.c.bf16 %v883, %v874
  %v1082 = vpack.c.bf16 %v884, %v875
  %v1083 = vpack.c.bf16 %v885, %v876
  %v1084 = vpack.c.bf16 %v895, %v886
  %v1085 = vpack.c.bf16 %v896, %v887
  %v1086 = vpack.c.bf16 %v897, %v888
  %v1087 = vpack.c.bf16 %v898, %v889
  %v1088 = vpack.c.bf16 %v899, %v890
  %v1089 = vpack.c.bf16 %v900, %v891
  %v1090 = vpack.c.bf16 %v901, %v892
  %v1091 = vpack.c.bf16 %v902, %v893
  %v1092 = vpack.c.bf16 %v903, %v894
  %v1093 = vpack.c.bf16 %v913, %v904
  %v1094 = vpack.c.bf16 %v914, %v905
  %v1095 = vpack.c.bf16 %v915, %v906
  %v1096 = vpack.c.bf16 %v916, %v907
  %v1097 = vpack.c.bf16 %v917, %v908
  %v1098 = vpack.c.bf16 %v918, %v909
  %v1099 = vpack.c.bf16 %v919, %v910
  %v1100 = vpack.c.bf16 %v920, %v911
  %v1101 = vpack.c.bf16 %v921, %v912
  %v1102 = vpack.c.bf16 %v931, %v922
  %v1103 = vpack.c.bf16 %v932, %v923
  %v1104 = vpack.c.bf16 %v933, %v924
  %v1105 = vpack.c.bf16 %v934, %v925
  %v1106 = vpack.c.bf16 %v935, %v926
  %v1107 = vpack.c.bf16 %v936, %v927
  %v1108 = vpack.c.bf16 %v937, %v928
  %v1109 = vpack.c.bf16 %v938, %v929
  %v1110 = vpack.c.bf16 %v939, %v930
  %v1111 = vpack.c.bf16 %v949, %v940
  %v1112 = vpack.c.bf16 %v950, %v941
  %v1113 = vpack.c.bf16 %v951, %v942
  %v1114 = vpack.c.bf16 %v952, %v943
  %v1115 = vpack.c.bf16 %v953, %v944
  %v1116 = vpack.c.bf16 %v954, %v945
  %v1117 = vpack.c.bf16 %v955, %v946
  %v1118 = vpack.c.bf16 %v956, %v947
  %v1119 = vpack.c.bf16 %v957, %v948
  %v1120 = vpack.c.bf16 %v967, %v958
  %v1121 = vpack.c.bf16 %v968, %v959
  %v1122 = vpack.c.bf16 %v969, %v960
  %v1123 = vpack.c.bf16 %v970, %v961
  %v1124 = vpack.c.bf16 %v971, %v962
  %v1125 = vpack.c.bf16 %v972, %v963
  %v1126 = vpack.c.bf16 %v973, %v964
  %v1127 = vpack.c.bf16 %v974, %v965
  %v1128 = vpack.c.bf16 %v975, %v966
  %v1129 = vpack.c.bf16 %v985, %v976
  %v1130 = vpack.c.bf16 %v986, %v977
  %v1131 = vpack.c.bf16 %v987, %v978
  %v1132 = vpack.c.bf16 %v988, %v979
  %v1133 = vpack.c.bf16 %v989, %v980
  %v1134 = vpack.c.bf16 %v990, %v981
  %v1135 = vpack.c.bf16 %v991, %v982
  %v1136 = vpack.c.bf16 %v992, %v983
  %v1137 = vpack.c.bf16 %v993, %v984
  %v1138 = vpack.c.bf16 %v1003, %v994
  %v1139 = vpack.c.bf16 %v1004, %v995
  %v1140 = vpack.c.bf16 %v1005, %v996
  %v1141 = vpack.c.bf16 %v1006, %v997
  %v1142 = vpack.c.bf16 %v1007, %v998
  %v1143 = vpack.c.bf16 %v1008, %v999
  %v1144 = vpack.c.bf16 %v1009, %v1000
  %v1145 = vpack.c.bf16 %v1010, %v1001
  %v1146 = vpack.c.bf16 %v1011, %v1002
  %v1147 = vpack.c.bf16 %v1021, %v1012
  %v1148 = vpack.c.bf16 %v1022, %v1013
  %v1149 = vpack.c.bf16 %v1023, %v1014
  %v1150 = vpack.c.bf16 %v1024, %v1015
  %v1151 = vpack.c.bf16 %v1025, %v1016
  %v1152 = vpack.c.bf16 %v1026, %v1017
  %v1153 = vpack.c.bf16 %v1027, %v1018
  %v1154 = vpack.c.bf16 %v1028, %v1019
  %v1155 = vpack.c.bf16 %v1029, %v1020
  %v1156 = vpack.c.bf16 %v1039, %v1030
  %v1157 = vpack.c.bf16 %v1040, %v1031
  %v1158 = vpack.c.bf16 %v1041, %v1032
  %v1159 = vpack.c.bf16 %v1042, %v1033
  %v1160 = vpack.c.bf16 %v1043, %v1034
  %v1161 = vpack.c.bf16 %v1044, %v1035
  %v1162 = vpack.c.bf16 %v1045, %v1036
  %v1163 = vpack.c.bf16 %v1046, %v1037
  %v1164 = vpack.c.bf16 %v1047, %v1038
  %v1165 = vpack.c.bf16 %v1057, %v1048
  %v1166 = vpack.c.bf16 %v1058, %v1049
  %v1167 = vpack.c.bf16 %v1059, %v1050
  %v1168 = vpack.c.bf16 %v1060, %v1051
  %v1169 = vpack.c.bf16 %v1061, %v1052
  %v1170 = vpack.c.bf16 %v1062, %v1053
  %v1171 = vpack.c.bf16 %v1063, %v1054
  %v1172 = vpack.c.bf16 %v1064, %v1055
  %v1173 = vpack.c.bf16 %v1065, %v1056
  %v1174 = vld [vmem:[%s0] sm:$0xff]
  %v1175 = vld [vmem:[%s0 + $0x8] sm:$0xff]
  %v1176 = vld [vmem:[%s0 + $0x10] sm:$0xff]
  %v1177 = vld [vmem:[%s0 + $0x18] sm:$0xff]
  %v1178 = vld [vmem:[%s0 + $0x20] sm:$0xff]
  %v1179 = vld [vmem:[%s0 + $0x28] sm:$0xff]
  %v1180 = vld [vmem:[%s0 + $0x30] sm:$0xff]
  %v1181 = vld [vmem:[%s0 + $0x38] sm:$0xff]
  %v1182 = vld [vmem:[%s0 + $0x40] sm:$0xff]
  %v1183 = vld [vmem:[%s0 + $0x48] sm:$0xff]
  %v1184 = vld [vmem:[%s0 + $0x50] sm:$0xff]
  %v1185 = vld [vmem:[%s0 + $0x58] sm:$0xff]
  %v1186 = vld [vmem:[%s0 + $0x60] sm:$0xff]
  %v1187 = vld [vmem:[%s0 + $0x68] sm:$0xff]
  %v1188 = vld [vmem:[%s0 + $0x70] sm:$0xff]
  %v1189 = vld [vmem:[%s0 + $0x78] sm:$0xff]
  %v1190 = vld [vmem:[%s0 + $0x80] sm:$0xff]
  %v1191 = vld [vmem:[%s0 + $0x88] sm:$0xff]
  %v1192 = vld [vmem:[%s0 + $0x90] sm:$0xff]
  %v1193 = vld [vmem:[%s0 + $0x98] sm:$0xff]
  %v1194 = vld [vmem:[%s0 + $0xa0] sm:$0xff]
  %v1195 = vld [vmem:[%s0 + $0xa8] sm:$0xff]
  %v1196 = vld [vmem:[%s0 + $0xb0] sm:$0xff]
  %v1197 = vld [vmem:[%s0 + $0xb8] sm:$0xff]
  %v1198 = vld [vmem:[%s0 + $0xc0] sm:$0xff]
  %v1199 = vld [vmem:[%s0 + $0xc8] sm:$0xff]
  %v1200 = vld [vmem:[%s0 + $0xd0] sm:$0xff]
  %v1201 = vld [vmem:[%s0 + $0xd8] sm:$0xff]
  %v1202 = vld [vmem:[%s0 + $0xe0] sm:$0xff]
  %v1203 = vld [vmem:[%s0 + $0xe8] sm:$0xff]
  %v1204 = vld [vmem:[%s0 + $0xf0] sm:$0xff]
  %v1205 = vld [vmem:[%s0 + $0xf8] sm:$0xff]
  %v1206 = vld [vmem:[%s0 + $0x100] sm:$0xff]
  %v1207 = vld [vmem:[%s0 + $0x108] sm:$0xff]
  %v1208 = vld [vmem:[%s0 + $0x110] sm:$0xff]
  %v1209 = vld [vmem:[%s0 + $0x118] sm:$0xff]
  %v1210 = vld [vmem:[%s0 + $0x120] sm:$0xff]
  %v1211 = vld [vmem:[%s0 + $0x128] sm:$0xff]
  %v1212 = vld [vmem:[%s0 + $0x130] sm:$0xff]
  %v1213 = vld [vmem:[%s0 + $0x138] sm:$0xff]
  %v1214 = vld [vmem:[%s0 + $0x140] sm:$0xff]
  %v1215 = vld [vmem:[%s0 + $0x148] sm:$0xff]
  %v1216 = vld [vmem:[%s0 + $0x150] sm:$0xff]
  %v1217 = vld [vmem:[%s0 + $0x158] sm:$0xff]
  %v1218 = vld [vmem:[%s0 + $0x160] sm:$0xff]
  %v1219 = vld [vmem:[%s0 + $0x168] sm:$0xff]
  %v1220 = vld [vmem:[%s0 + $0x170] sm:$0xff]
  %v1221 = vld [vmem:[%s0 + $0x178] sm:$0xff]
  %v1222 = vld [vmem:[%s0 + $0x180] sm:$0xff]
  %v1223 = vld [vmem:[%s0 + $0x188] sm:$0xff]
  %v1224 = vld [vmem:[%s0 + $0x190] sm:$0xff]
  %v1225 = vld [vmem:[%s0 + $0x198] sm:$0xff]
  %v1226 = vld [vmem:[%s0 + $0x1a0] sm:$0xff]
  %v1227 = vld [vmem:[%s0 + $0x1a8] sm:$0xff]
  %v1228 = vld [vmem:[%s0 + $0x1b0] sm:$0xff]
  %v1229 = vld [vmem:[%s0 + $0x1b8] sm:$0xff]
  %v1230 = vld [vmem:[%s0 + $0x1c0] sm:$0xff]
  %v1231 = vld [vmem:[%s0 + $0x1c8] sm:$0xff]
  %v1232 = vld [vmem:[%s0 + $0x1d0] sm:$0xff]
  %v1233 = vld [vmem:[%s0 + $0x1d8] sm:$0xff]
  %v1234 = vld [vmem:[%s0 + $0x1e0] sm:$0xff]
  %v1235 = vld [vmem:[%s0 + $0x1e8] sm:$0xff]
  %v1236 = vld [vmem:[%s0 + $0x1f0] sm:$0xff]
  %v1237 = vld [vmem:[%s0 + $0x1f8] sm:$0xff]
  %v1238 = vld [vmem:[%s0 + $0x200] sm:$0xff]
  %v1239 = vld [vmem:[%s0 + $0x208] sm:$0xff]
  %v1240 = vld [vmem:[%s0 + $0x210] sm:$0xff]
  %v1241 = vld [vmem:[%s0 + $0x218] sm:$0xff]
  %v1242 = vld [vmem:[%s0 + $0x220] sm:$0xff]
  %v1243 = vld [vmem:[%s0 + $0x228] sm:$0xff]
  %v1244 = vld [vmem:[%s0 + $0x230] sm:$0xff]
  %v1245 = vld [vmem:[%s0 + $0x238] sm:$0xff]
  %v1246 = vld [vmem:[%s0 + $0x240] sm:$0xff]
  %v1247 = vld [vmem:[%s0 + $0x248] sm:$0xff]
  %v1248 = vld [vmem:[%s0 + $0x250] sm:$0xff]
  %v1249 = vld [vmem:[%s0 + $0x258] sm:$0xff]
  %v1250 = vld [vmem:[%s0 + $0x260] sm:$0xff]
  %v1251 = vld [vmem:[%s0 + $0x268] sm:$0xff]
  %v1252 = vld [vmem:[%s0 + $0x270] sm:$0xff]
  %v1253 = vld [vmem:[%s0 + $0x278] sm:$0xff]
  %v1254 = vld [vmem:[%s0 + $0x280] sm:$0xff]
  %v1255 = vld [vmem:[%s0 + $0x288] sm:$0xff]
  %v1256 = vld [vmem:[%s0 + $0x290] sm:$0xff]
  %v1257 = vld [vmem:[%s0 + $0x298] sm:$0xff]
  %v1258 = vld [vmem:[%s0 + $0x2a0] sm:$0xff]
  %v1259 = vld [vmem:[%s0 + $0x2a8] sm:$0xff]
  %v1260 = vld [vmem:[%s0 + $0x2b0] sm:$0xff]
  %v1261 = vld [vmem:[%s0 + $0x2b8] sm:$0xff]
  %v1262 = vld [vmem:[%s0 + $0x2c0] sm:$0xff]
  %v1263 = vld [vmem:[%s0 + $0x2c8] sm:$0xff]
  %v1264 = vld [vmem:[%s0 + $0x2d0] sm:$0xff]
  %v1265 = vld [vmem:[%s0 + $0x2d8] sm:$0xff]
  %v1266 = vld [vmem:[%s0 + $0x2e0] sm:$0xff]
  %v1267 = vld [vmem:[%s0 + $0x2e8] sm:$0xff]
  %v1268 = vld [vmem:[%s0 + $0x2f0] sm:$0xff]
  %v1269 = vld [vmem:[%s0 + $0x2f8] sm:$0xff]
  %v1270 = vld [vmem:[%s0 + $0x300] sm:$0xff]
  %v1271 = vld [vmem:[%s0 + $0x308] sm:$0xff]
  %v1272 = vld [vmem:[%s0 + $0x310] sm:$0xff]
  %v1273 = vld [vmem:[%s0 + $0x318] sm:$0xff]
  %v1274 = vld [vmem:[%s0 + $0x320] sm:$0xff]
  %v1275 = vld [vmem:[%s0 + $0x328] sm:$0xff]
  %v1276 = vld [vmem:[%s0 + $0x330] sm:$0xff]
  %v1277 = vld [vmem:[%s0 + $0x338] sm:$0xff]
  %v1278 = vld [vmem:[%s0 + $0x340] sm:$0xff]
  %v1279 = vld [vmem:[%s0 + $0x348] sm:$0xff]
  %v1280 = vld [vmem:[%s0 + $0x350] sm:$0xff]
  %v1281 = vld [vmem:[%s0 + $0x358] sm:$0xff]
  %v1282 = vld [vmem:[%s0 + $0x360] sm:$0xff]
  %v1283 = vld [vmem:[%s0 + $0x368] sm:$0xff]
  %v1284 = vld [vmem:[%s0 + $0x370] sm:$0xff]
  %v1285 = vld [vmem:[%s0 + $0x378] sm:$0xff]
  %v1286 = vld [vmem:[%s0 + $0x380] sm:$0xff]
  %v1287 = vld [vmem:[%s0 + $0x388] sm:$0xff]
  %v1288 = vld [vmem:[%s0 + $0x390] sm:$0xff]
  %v1289 = vld [vmem:[%s0 + $0x398] sm:$0xff]
  %v1290 = vld [vmem:[%s0 + $0x3a0] sm:$0xff]
  %v1291 = vld [vmem:[%s0 + $0x3a8] sm:$0xff]
  %v1292 = vld [vmem:[%s0 + $0x3b0] sm:$0xff]
  %v1293 = vld [vmem:[%s0 + $0x3b8] sm:$0xff]
  %v1294 = vld [vmem:[%s0 + $0x3c0] sm:$0xff]
  %v1295 = vld [vmem:[%s0 + $0x3c8] sm:$0xff]
  %v1296 = vld [vmem:[%s0 + $0x3d0] sm:$0xff]
  %v1297 = vld [vmem:[%s0 + $0x3d8] sm:$0xff]
  %v1298 = vld [vmem:[%s0 + $0x3e0] sm:$0xff]
  %v1299 = vld [vmem:[%s0 + $0x3e8] sm:$0xff]
  %v1300 = vld [vmem:[%s0 + $0x3f0] sm:$0xff]
  %v1301 = vld [vmem:[%s0 + $0x3f8] sm:$0xff]
  %v1302 = vld [vmem:[%s0 + $0x400] sm:$0xff]
  %v1303 = vld [vmem:[%s0 + $0x408] sm:$0xff]
  %v1304 = vld [vmem:[%s0 + $0x410] sm:$0xff]
  %v1305 = vld [vmem:[%s0 + $0x418] sm:$0xff]
  %v1306 = vld [vmem:[%s0 + $0x420] sm:$0xff]
  %v1307 = vld [vmem:[%s0 + $0x428] sm:$0xff]
  %v1308 = vld [vmem:[%s0 + $0x430] sm:$0xff]
  %v1309 = vld [vmem:[%s0 + $0x438] sm:$0xff]
  %v1310 = vld [vmem:[%s0 + $0x440] sm:$0xff]
  %v1311 = vld [vmem:[%s0 + $0x448] sm:$0xff]
  %v1312 = vld [vmem:[%s0 + $0x450] sm:$0xff]
  %v1313 = vld [vmem:[%s0 + $0x458] sm:$0xff]
  %v1314 = vld [vmem:[%s0 + $0x460] sm:$0xff]
  %v1315 = vld [vmem:[%s0 + $0x468] sm:$0xff]
  %v1316 = vld [vmem:[%s0 + $0x470] sm:$0xff]
  %v1317 = vld [vmem:[%s0 + $0x478] sm:$0xff]
  %v1318 = vpack.c.bf16 %v1175, %v1174
  %v1319 = vpack.c.bf16 %v1177, %v1176
  %v1320 = vpack.c.bf16 %v1179, %v1178
  %v1321 = vpack.c.bf16 %v1181, %v1180
  %v1322 = vpack.c.bf16 %v1183, %v1182
  %v1323 = vpack.c.bf16 %v1185, %v1184
  %v1324 = vpack.c.bf16 %v1187, %v1186
  %v1325 = vpack.c.bf16 %v1189, %v1188
  %v1326 = vpack.c.bf16 %v1191, %v1190
  %v1327 = vpack.c.bf16 %v1193, %v1192
  %v1328 = vpack.c.bf16 %v1195, %v1194
  %v1329 = vpack.c.bf16 %v1197, %v1196
  %v1330 = vpack.c.bf16 %v1199, %v1198
  %v1331 = vpack.c.bf16 %v1201, %v1200
  %v1332 = vpack.c.bf16 %v1203, %v1202
  %v1333 = vpack.c.bf16 %v1205, %v1204
  %v1334 = vpack.c.bf16 %v1207, %v1206
  %v1335 = vpack.c.bf16 %v1209, %v1208
  %v1336 = vpack.c.bf16 %v1211, %v1210
  %v1337 = vpack.c.bf16 %v1213, %v1212
  %v1338 = vpack.c.bf16 %v1215, %v1214
  %v1339 = vpack.c.bf16 %v1217, %v1216
  %v1340 = vpack.c.bf16 %v1219, %v1218
  %v1341 = vpack.c.bf16 %v1221, %v1220
  %v1342 = vpack.c.bf16 %v1223, %v1222
  %v1343 = vpack.c.bf16 %v1225, %v1224
  %v1344 = vpack.c.bf16 %v1227, %v1226
  %v1345 = vpack.c.bf16 %v1229, %v1228
  %v1346 = vpack.c.bf16 %v1231, %v1230
  %v1347 = vpack.c.bf16 %v1233, %v1232
  %v1348 = vpack.c.bf16 %v1235, %v1234
  %v1349 = vpack.c.bf16 %v1237, %v1236
  %v1350 = vpack.c.bf16 %v1239, %v1238
  %v1351 = vpack.c.bf16 %v1241, %v1240
  %v1352 = vpack.c.bf16 %v1243, %v1242
  %v1353 = vpack.c.bf16 %v1245, %v1244
  %v1354 = vpack.c.bf16 %v1247, %v1246
  %v1355 = vpack.c.bf16 %v1249, %v1248
  %v1356 = vpack.c.bf16 %v1251, %v1250
  %v1357 = vpack.c.bf16 %v1253, %v1252
  %v1358 = vpack.c.bf16 %v1255, %v1254
  %v1359 = vpack.c.bf16 %v1257, %v1256
  %v1360 = vpack.c.bf16 %v1259, %v1258
  %v1361 = vpack.c.bf16 %v1261, %v1260
  %v1362 = vpack.c.bf16 %v1263, %v1262
  %v1363 = vpack.c.bf16 %v1265, %v1264
  %v1364 = vpack.c.bf16 %v1267, %v1266
  %v1365 = vpack.c.bf16 %v1269, %v1268
  %v1366 = vpack.c.bf16 %v1271, %v1270
  %v1367 = vpack.c.bf16 %v1273, %v1272
  %v1368 = vpack.c.bf16 %v1275, %v1274
  %v1369 = vpack.c.bf16 %v1277, %v1276
  %v1370 = vpack.c.bf16 %v1279, %v1278
  %v1371 = vpack.c.bf16 %v1281, %v1280
  %v1372 = vpack.c.bf16 %v1283, %v1282
  %v1373 = vpack.c.bf16 %v1285, %v1284
  %v1374 = vpack.c.bf16 %v1287, %v1286
  %v1375 = vpack.c.bf16 %v1289, %v1288
  %v1376 = vpack.c.bf16 %v1291, %v1290
  %v1377 = vpack.c.bf16 %v1293, %v1292
  %v1378 = vpack.c.bf16 %v1295, %v1294
  %v1379 = vpack.c.bf16 %v1297, %v1296
  %v1380 = vpack.c.bf16 %v1299, %v1298
  %v1381 = vpack.c.bf16 %v1301, %v1300
  %v1382 = vpack.c.bf16 %v1303, %v1302
  %v1383 = vpack.c.bf16 %v1305, %v1304
  %v1384 = vpack.c.bf16 %v1307, %v1306
  %v1385 = vpack.c.bf16 %v1309, %v1308
  %v1386 = vpack.c.bf16 %v1311, %v1310
  %v1387 = vpack.c.bf16 %v1313, %v1312
  %v1388 = vpack.c.bf16 %v1315, %v1314
  %v1389 = vpack.c.bf16 %v1317, %v1316
  %1390 = vmatpush.bf16.msra.mxu0 %v1325
  %1391 = vmatpush.bf16.msra.mxu0 %v1324
  %1392 = vmatpush.bf16.msra.mxu0 %v1323
  %1393 = vmatpush.bf16.msra.mxu0 %v1322
  %1394 = vmatpush.bf16.msra.mxu0 %v1321
  %1395 = vmatpush.bf16.msra.mxu0 %v1320
  %1396 = vmatpush.bf16.msra.mxu0 %v1319
  %1397 = vmatpush.bf16.msra.mxu0 %v1318
  %1398 = vmatmul.bf16.gmra.mxu0 %v1066
  %v1399 = vpop.f32.mrf.mxu0
  %v1400 = vadd.f32 0.0, %v1399
  %v1401 = vpop.f32.mrf.mxu0
  %v1402 = vadd.f32 0.0, %v1401
  %1403 = vmatmul.bf16.gmra.mxu0 %v1075
  %v1404 = vpop.f32.mrf.mxu0
  %v1405 = vadd.f32 0.0, %v1404
  %v1406 = vpop.f32.mrf.mxu0
  %v1407 = vadd.f32 0.0, %v1406
  %1408 = vmatmul.bf16.gmra.mxu0 %v1084
  %v1409 = vpop.f32.mrf.mxu0
  %v1410 = vadd.f32 0.0, %v1409
  %v1411 = vpop.f32.mrf.mxu0
  %v1412 = vadd.f32 0.0, %v1411
  %1413 = vmatmul.bf16.gmra.mxu0 %v1093
  %v1414 = vpop.f32.mrf.mxu0
  %v1415 = vadd.f32 0.0, %v1414
  %v1416 = vpop.f32.mrf.mxu0
  %v1417 = vadd.f32 0.0, %v1416
  %1418 = vmatmul.bf16.gmra.mxu0 %v1102
  %v1419 = vpop.f32.mrf.mxu0
  %v1420 = vadd.f32 0.0, %v1419
  %v1421 = vpop.f32.mrf.mxu0
  %v1422 = vadd.f32 0.0, %v1421
  %1423 = vmatmul.bf16.gmra.mxu0 %v1111
  %v1424 = vpop.f32.mrf.mxu0
  %v1425 = vadd.f32 0.0, %v1424
  %v1426 = vpop.f32.mrf.mxu0
  %v1427 = vadd.f32 0.0, %v1426
  %1428 = vmatmul.bf16.gmra.mxu0 %v1120
  %v1429 = vpop.f32.mrf.mxu0
  %v1430 = vadd.f32 0.0, %v1429
  %v1431 = vpop.f32.mrf.mxu0
  %v1432 = vadd.f32 0.0, %v1431
  %1433 = vmatmul.bf16.gmra.mxu0 %v1129
  %v1434 = vpop.f32.mrf.mxu0
  %v1435 = vadd.f32 0.0, %v1434
  %v1436 = vpop.f32.mrf.mxu0
  %v1437 = vadd.f32 0.0, %v1436
  %1438 = vmatmul.bf16.gmra.mxu0 %v1138
  %v1439 = vpop.f32.mrf.mxu0
  %v1440 = vadd.f32 0.0, %v1439
  %v1441 = vpop.f32.mrf.mxu0
  %v1442 = vadd.f32 0.0, %v1441
  %1443 = vmatmul.bf16.gmra.mxu0 %v1147
  %v1444 = vpop.f32.mrf.mxu0
  %v1445 = vadd.f32 0.0, %v1444
  %v1446 = vpop.f32.mrf.mxu0
  %v1447 = vadd.f32 0.0, %v1446
  %1448 = vmatmul.bf16.gmra.mxu0 %v1156
  %v1449 = vpop.f32.mrf.mxu0
  %v1450 = vadd.f32 0.0, %v1449
  %v1451 = vpop.f32.mrf.mxu0
  %v1452 = vadd.f32 0.0, %v1451
  %1453 = vmatmul.bf16.gmra.mxu0 %v1165
  %v1454 = vpop.f32.mrf.mxu0
  %v1455 = vadd.f32 0.0, %v1454
  %v1456 = vpop.f32.mrf.mxu0
  %v1457 = vadd.f32 0.0, %v1456
  %1458 = vdwg.mxu0
  %1459 = vmatpush.bf16.msra.mxu0 %v1333
  %1460 = vmatpush.bf16.msra.mxu0 %v1332
  %1461 = vmatpush.bf16.msra.mxu0 %v1331
  %1462 = vmatpush.bf16.msra.mxu0 %v1330
  %1463 = vmatpush.bf16.msra.mxu0 %v1329
  %1464 = vmatpush.bf16.msra.mxu0 %v1328
  %1465 = vmatpush.bf16.msra.mxu0 %v1327
  %1466 = vmatpush.bf16.msra.mxu0 %v1326
  %1467 = vmatmul.bf16.gmra.mxu0 %v1067
  %v1468 = vpop.f32.mrf.mxu0
  %v1469 = vadd.f32 %v1400, %v1468
  %v1470 = vpop.f32.mrf.mxu0
  %v1471 = vadd.f32 %v1402, %v1470
  %1472 = vmatmul.bf16.gmra.mxu0 %v1076
  %v1473 = vpop.f32.mrf.mxu0
  %v1474 = vadd.f32 %v1405, %v1473
  %v1475 = vpop.f32.mrf.mxu0
  %v1476 = vadd.f32 %v1407, %v1475
  %1477 = vmatmul.bf16.gmra.mxu0 %v1085
  %v1478 = vpop.f32.mrf.mxu0
  %v1479 = vadd.f32 %v1410, %v1478
  %v1480 = vpop.f32.mrf.mxu0
  %v1481 = vadd.f32 %v1412, %v1480
  %1482 = vmatmul.bf16.gmra.mxu0 %v1094
  %v1483 = vpop.f32.mrf.mxu0
  %v1484 = vadd.f32 %v1415, %v1483
  %v1485 = vpop.f32.mrf.mxu0
  %v1486 = vadd.f32 %v1417, %v1485
  %1487 = vmatmul.bf16.gmra.mxu0 %v1103
  %v1488 = vpop.f32.mrf.mxu0
  %v1489 = vadd.f32 %v1420, %v1488
  %v1490 = vpop.f32.mrf.mxu0
  %v1491 = vadd.f32 %v1422, %v1490
  %1492 = vmatmul.bf16.gmra.mxu0 %v1112
  %v1493 = vpop.f32.mrf.mxu0
  %v1494 = vadd.f32 %v1425, %v1493
  %v1495 = vpop.f32.mrf.mxu0
  %v1496 = vadd.f32 %v1427, %v1495
  %1497 = vmatmul.bf16.gmra.mxu0 %v1121
  %v1498 = vpop.f32.mrf.mxu0
  %v1499 = vadd.f32 %v1430, %v1498
  %v1500 = vpop.f32.mrf.mxu0
  %v1501 = vadd.f32 %v1432, %v1500
  %1502 = vmatmul.bf16.gmra.mxu0 %v1130
  %v1503 = vpop.f32.mrf.mxu0
  %v1504 = vadd.f32 %v1435, %v1503
  %v1505 = vpop.f32.mrf.mxu0
  %v1506 = vadd.f32 %v1437, %v1505
  %1507 = vmatmul.bf16.gmra.mxu0 %v1139
  %v1508 = vpop.f32.mrf.mxu0
  %v1509 = vadd.f32 %v1440, %v1508
  %v1510 = vpop.f32.mrf.mxu0
  %v1511 = vadd.f32 %v1442, %v1510
  %1512 = vmatmul.bf16.gmra.mxu0 %v1148
  %v1513 = vpop.f32.mrf.mxu0
  %v1514 = vadd.f32 %v1445, %v1513
  %v1515 = vpop.f32.mrf.mxu0
  %v1516 = vadd.f32 %v1447, %v1515
  %1517 = vmatmul.bf16.gmra.mxu0 %v1157
  %v1518 = vpop.f32.mrf.mxu0
  %v1519 = vadd.f32 %v1450, %v1518
  %v1520 = vpop.f32.mrf.mxu0
  %v1521 = vadd.f32 %v1452, %v1520
  %1522 = vmatmul.bf16.gmra.mxu0 %v1166
  %v1523 = vpop.f32.mrf.mxu0
  %v1524 = vadd.f32 %v1455, %v1523
  %v1525 = vpop.f32.mrf.mxu0
  %v1526 = vadd.f32 %v1457, %v1525
  %1527 = vdwg.mxu0
  %1528 = vmatpush.bf16.msra.mxu0 %v1341
  %1529 = vmatpush.bf16.msra.mxu0 %v1340
  %1530 = vmatpush.bf16.msra.mxu0 %v1339
  %1531 = vmatpush.bf16.msra.mxu0 %v1338
  %1532 = vmatpush.bf16.msra.mxu0 %v1337
  %1533 = vmatpush.bf16.msra.mxu0 %v1336
  %1534 = vmatpush.bf16.msra.mxu0 %v1335
  %1535 = vmatpush.bf16.msra.mxu0 %v1334
  %1536 = vmatmul.bf16.gmra.mxu0 %v1068
  %v1537 = vpop.f32.mrf.mxu0
  %v1538 = vadd.f32 %v1469, %v1537
  %v1539 = vpop.f32.mrf.mxu0
  %v1540 = vadd.f32 %v1471, %v1539
  %1541 = vmatmul.bf16.gmra.mxu0 %v1077
  %v1542 = vpop.f32.mrf.mxu0
  %v1543 = vadd.f32 %v1474, %v1542
  %v1544 = vpop.f32.mrf.mxu0
  %v1545 = vadd.f32 %v1476, %v1544
  %1546 = vmatmul.bf16.gmra.mxu0 %v1086
  %v1547 = vpop.f32.mrf.mxu0
  %v1548 = vadd.f32 %v1479, %v1547
  %v1549 = vpop.f32.mrf.mxu0
  %v1550 = vadd.f32 %v1481, %v1549
  %1551 = vmatmul.bf16.gmra.mxu0 %v1095
  %v1552 = vpop.f32.mrf.mxu0
  %v1553 = vadd.f32 %v1484, %v1552
  %v1554 = vpop.f32.mrf.mxu0
  %v1555 = vadd.f32 %v1486, %v1554
  %1556 = vmatmul.bf16.gmra.mxu0 %v1104
  %v1557 = vpop.f32.mrf.mxu0
  %v1558 = vadd.f32 %v1489, %v1557
  %v1559 = vpop.f32.mrf.mxu0
  %v1560 = vadd.f32 %v1491, %v1559
  %1561 = vmatmul.bf16.gmra.mxu0 %v1113
  %v1562 = vpop.f32.mrf.mxu0
  %v1563 = vadd.f32 %v1494, %v1562
  %v1564 = vpop.f32.mrf.mxu0
  %v1565 = vadd.f32 %v1496, %v1564
  %1566 = vmatmul.bf16.gmra.mxu0 %v1122
  %v1567 = vpop.f32.mrf.mxu0
  %v1568 = vadd.f32 %v1499, %v1567
  %v1569 = vpop.f32.mrf.mxu0
  %v1570 = vadd.f32 %v1501, %v1569
  %1571 = vmatmul.bf16.gmra.mxu0 %v1131
  %v1572 = vpop.f32.mrf.mxu0
  %v1573 = vadd.f32 %v1504, %v1572
  %v1574 = vpop.f32.mrf.mxu0
  %v1575 = vadd.f32 %v1506, %v1574
  %1576 = vmatmul.bf16.gmra.mxu0 %v1140
  %v1577 = vpop.f32.mrf.mxu0
  %v1578 = vadd.f32 %v1509, %v1577
  %v1579 = vpop.f32.mrf.mxu0
  %v1580 = vadd.f32 %v1511, %v1579
  %1581 = vmatmul.bf16.gmra.mxu0 %v1149
  %v1582 = vpop.f32.mrf.mxu0
  %v1583 = vadd.f32 %v1514, %v1582
  %v1584 = vpop.f32.mrf.mxu0
  %v1585 = vadd.f32 %v1516, %v1584
  %1586 = vmatmul.bf16.gmra.mxu0 %v1158
  %v1587 = vpop.f32.mrf.mxu0
  %v1588 = vadd.f32 %v1519, %v1587
  %v1589 = vpop.f32.mrf.mxu0
  %v1590 = vadd.f32 %v1521, %v1589
  %1591 = vmatmul.bf16.gmra.mxu0 %v1167
  %v1592 = vpop.f32.mrf.mxu0
  %v1593 = vadd.f32 %v1524, %v1592
  %v1594 = vpop.f32.mrf.mxu0
  %v1595 = vadd.f32 %v1526, %v1594
  %1596 = vdwg.mxu0
  %1597 = vmatpush.bf16.msra.mxu0 %v1349
  %1598 = vmatpush.bf16.msra.mxu0 %v1348
  %1599 = vmatpush.bf16.msra.mxu0 %v1347
  %1600 = vmatpush.bf16.msra.mxu0 %v1346
  %1601 = vmatpush.bf16.msra.mxu0 %v1345
  %1602 = vmatpush.bf16.msra.mxu0 %v1344
  %1603 = vmatpush.bf16.msra.mxu0 %v1343
  %1604 = vmatpush.bf16.msra.mxu0 %v1342
  %1605 = vmatmul.bf16.gmra.mxu0 %v1069
  %v1606 = vpop.f32.mrf.mxu0
  %v1607 = vadd.f32 %v1538, %v1606
  %v1608 = vpop.f32.mrf.mxu0
  %v1609 = vadd.f32 %v1540, %v1608
  %1610 = vmatmul.bf16.gmra.mxu0 %v1078
  %v1611 = vpop.f32.mrf.mxu0
  %v1612 = vadd.f32 %v1543, %v1611
  %v1613 = vpop.f32.mrf.mxu0
  %v1614 = vadd.f32 %v1545, %v1613
  %1615 = vmatmul.bf16.gmra.mxu0 %v1087
  %v1616 = vpop.f32.mrf.mxu0
  %v1617 = vadd.f32 %v1548, %v1616
  %v1618 = vpop.f32.mrf.mxu0
  %v1619 = vadd.f32 %v1550, %v1618
  %1620 = vmatmul.bf16.gmra.mxu0 %v1096
  %v1621 = vpop.f32.mrf.mxu0
  %v1622 = vadd.f32 %v1553, %v1621
  %v1623 = vpop.f32.mrf.mxu0
  %v1624 = vadd.f32 %v1555, %v1623
  %1625 = vmatmul.bf16.gmra.mxu0 %v1105
  %v1626 = vpop.f32.mrf.mxu0
  %v1627 = vadd.f32 %v1558, %v1626
  %v1628 = vpop.f32.mrf.mxu0
  %v1629 = vadd.f32 %v1560, %v1628
  %1630 = vmatmul.bf16.gmra.mxu0 %v1114
  %v1631 = vpop.f32.mrf.mxu0
  %v1632 = vadd.f32 %v1563, %v1631
  %v1633 = vpop.f32.mrf.mxu0
  %v1634 = vadd.f32 %v1565, %v1633
  %1635 = vmatmul.bf16.gmra.mxu0 %v1123
  %v1636 = vpop.f32.mrf.mxu0
  %v1637 = vadd.f32 %v1568, %v1636
  %v1638 = vpop.f32.mrf.mxu0
  %v1639 = vadd.f32 %v1570, %v1638
  %1640 = vmatmul.bf16.gmra.mxu0 %v1132
  %v1641 = vpop.f32.mrf.mxu0
  %v1642 = vadd.f32 %v1573, %v1641
  %v1643 = vpop.f32.mrf.mxu0
  %v1644 = vadd.f32 %v1575, %v1643
  %1645 = vmatmul.bf16.gmra.mxu0 %v1141
  %v1646 = vpop.f32.mrf.mxu0
  %v1647 = vadd.f32 %v1578, %v1646
  %v1648 = vpop.f32.mrf.mxu0
  %v1649 = vadd.f32 %v1580, %v1648
  %1650 = vmatmul.bf16.gmra.mxu0 %v1150
  %v1651 = vpop.f32.mrf.mxu0
  %v1652 = vadd.f32 %v1583, %v1651
  %v1653 = vpop.f32.mrf.mxu0
  %v1654 = vadd.f32 %v1585, %v1653
  %1655 = vmatmul.bf16.gmra.mxu0 %v1159
  %v1656 = vpop.f32.mrf.mxu0
  %v1657 = vadd.f32 %v1588, %v1656
  %v1658 = vpop.f32.mrf.mxu0
  %v1659 = vadd.f32 %v1590, %v1658
  %1660 = vmatmul.bf16.gmra.mxu0 %v1168
  %v1661 = vpop.f32.mrf.mxu0
  %v1662 = vadd.f32 %v1593, %v1661
  %v1663 = vpop.f32.mrf.mxu0
  %v1664 = vadd.f32 %v1595, %v1663
  %1665 = vdwg.mxu0
  %1666 = vmatpush.bf16.msra.mxu0 %v1357
  %1667 = vmatpush.bf16.msra.mxu0 %v1356
  %1668 = vmatpush.bf16.msra.mxu0 %v1355
  %1669 = vmatpush.bf16.msra.mxu0 %v1354
  %1670 = vmatpush.bf16.msra.mxu0 %v1353
  %1671 = vmatpush.bf16.msra.mxu0 %v1352
  %1672 = vmatpush.bf16.msra.mxu0 %v1351
  %1673 = vmatpush.bf16.msra.mxu0 %v1350
  %1674 = vmatmul.bf16.gmra.mxu0 %v1070
  %v1675 = vpop.f32.mrf.mxu0
  %v1676 = vadd.f32 %v1607, %v1675
  %v1677 = vpop.f32.mrf.mxu0
  %v1678 = vadd.f32 %v1609, %v1677
  %1679 = vmatmul.bf16.gmra.mxu0 %v1079
  %v1680 = vpop.f32.mrf.mxu0
  %v1681 = vadd.f32 %v1612, %v1680
  %v1682 = vpop.f32.mrf.mxu0
  %v1683 = vadd.f32 %v1614, %v1682
  %1684 = vmatmul.bf16.gmra.mxu0 %v1088
  %v1685 = vpop.f32.mrf.mxu0
  %v1686 = vadd.f32 %v1617, %v1685
  %v1687 = vpop.f32.mrf.mxu0
  %v1688 = vadd.f32 %v1619, %v1687
  %1689 = vmatmul.bf16.gmra.mxu0 %v1097
  %v1690 = vpop.f32.mrf.mxu0
  %v1691 = vadd.f32 %v1622, %v1690
  %v1692 = vpop.f32.mrf.mxu0
  %v1693 = vadd.f32 %v1624, %v1692
  %1694 = vmatmul.bf16.gmra.mxu0 %v1106
  %v1695 = vpop.f32.mrf.mxu0
  %v1696 = vadd.f32 %v1627, %v1695
  %v1697 = vpop.f32.mrf.mxu0
  %v1698 = vadd.f32 %v1629, %v1697
  %1699 = vmatmul.bf16.gmra.mxu0 %v1115
  %v1700 = vpop.f32.mrf.mxu0
  %v1701 = vadd.f32 %v1632, %v1700
  %v1702 = vpop.f32.mrf.mxu0
  %v1703 = vadd.f32 %v1634, %v1702
  %1704 = vmatmul.bf16.gmra.mxu0 %v1124
  %v1705 = vpop.f32.mrf.mxu0
  %v1706 = vadd.f32 %v1637, %v1705
  %v1707 = vpop.f32.mrf.mxu0
  %v1708 = vadd.f32 %v1639, %v1707
  %1709 = vmatmul.bf16.gmra.mxu0 %v1133
  %v1710 = vpop.f32.mrf.mxu0
  %v1711 = vadd.f32 %v1642, %v1710
  %v1712 = vpop.f32.mrf.mxu0
  %v1713 = vadd.f32 %v1644, %v1712
  %1714 = vmatmul.bf16.gmra.mxu0 %v1142
  %v1715 = vpop.f32.mrf.mxu0
  %v1716 = vadd.f32 %v1647, %v1715
  %v1717 = vpop.f32.mrf.mxu0
  %v1718 = vadd.f32 %v1649, %v1717
  %1719 = vmatmul.bf16.gmra.mxu0 %v1151
  %v1720 = vpop.f32.mrf.mxu0
  %v1721 = vadd.f32 %v1652, %v1720
  %v1722 = vpop.f32.mrf.mxu0
  %v1723 = vadd.f32 %v1654, %v1722
  %1724 = vmatmul.bf16.gmra.mxu0 %v1160
  %v1725 = vpop.f32.mrf.mxu0
  %v1726 = vadd.f32 %v1657, %v1725
  %v1727 = vpop.f32.mrf.mxu0
  %v1728 = vadd.f32 %v1659, %v1727
  %1729 = vmatmul.bf16.gmra.mxu0 %v1169
  %v1730 = vpop.f32.mrf.mxu0
  %v1731 = vadd.f32 %v1662, %v1730
  %v1732 = vpop.f32.mrf.mxu0
  %v1733 = vadd.f32 %v1664, %v1732
  %1734 = vdwg.mxu0
  %1735 = vmatpush.bf16.msra.mxu0 %v1365
  %1736 = vmatpush.bf16.msra.mxu0 %v1364
  %1737 = vmatpush.bf16.msra.mxu0 %v1363
  %1738 = vmatpush.bf16.msra.mxu0 %v1362
  %1739 = vmatpush.bf16.msra.mxu0 %v1361
  %1740 = vmatpush.bf16.msra.mxu0 %v1360
  %1741 = vmatpush.bf16.msra.mxu0 %v1359
  %1742 = vmatpush.bf16.msra.mxu0 %v1358
  %1743 = vmatmul.bf16.gmra.mxu0 %v1071
  %v1744 = vpop.f32.mrf.mxu0
  %v1745 = vadd.f32 %v1676, %v1744
  %v1746 = vpop.f32.mrf.mxu0
  %v1747 = vadd.f32 %v1678, %v1746
  %1748 = vmatmul.bf16.gmra.mxu0 %v1080
  %v1749 = vpop.f32.mrf.mxu0
  %v1750 = vadd.f32 %v1681, %v1749
  %v1751 = vpop.f32.mrf.mxu0
  %v1752 = vadd.f32 %v1683, %v1751
  %1753 = vmatmul.bf16.gmra.mxu0 %v1089
  %v1754 = vpop.f32.mrf.mxu0
  %v1755 = vadd.f32 %v1686, %v1754
  %v1756 = vpop.f32.mrf.mxu0
  %v1757 = vadd.f32 %v1688, %v1756
  %1758 = vmatmul.bf16.gmra.mxu0 %v1098
  %v1759 = vpop.f32.mrf.mxu0
  %v1760 = vadd.f32 %v1691, %v1759
  %v1761 = vpop.f32.mrf.mxu0
  %v1762 = vadd.f32 %v1693, %v1761
  %1763 = vmatmul.bf16.gmra.mxu0 %v1107
  %v1764 = vpop.f32.mrf.mxu0
  %v1765 = vadd.f32 %v1696, %v1764
  %v1766 = vpop.f32.mrf.mxu0
  %v1767 = vadd.f32 %v1698, %v1766
  %1768 = vmatmul.bf16.gmra.mxu0 %v1116
  %v1769 = vpop.f32.mrf.mxu0
  %v1770 = vadd.f32 %v1701, %v1769
  %v1771 = vpop.f32.mrf.mxu0
  %v1772 = vadd.f32 %v1703, %v1771
  %1773 = vmatmul.bf16.gmra.mxu0 %v1125
  %v1774 = vpop.f32.mrf.mxu0
  %v1775 = vadd.f32 %v1706, %v1774
  %v1776 = vpop.f32.mrf.mxu0
  %v1777 = vadd.f32 %v1708, %v1776
  %1778 = vmatmul.bf16.gmra.mxu0 %v1134
  %v1779 = vpop.f32.mrf.mxu0
  %v1780 = vadd.f32 %v1711, %v1779
  %v1781 = vpop.f32.mrf.mxu0
  %v1782 = vadd.f32 %v1713, %v1781
  %1783 = vmatmul.bf16.gmra.mxu0 %v1143
  %v1784 = vpop.f32.mrf.mxu0
  %v1785 = vadd.f32 %v1716, %v1784
  %v1786 = vpop.f32.mrf.mxu0
  %v1787 = vadd.f32 %v1718, %v1786
  %1788 = vmatmul.bf16.gmra.mxu0 %v1152
  %v1789 = vpop.f32.mrf.mxu0
  %v1790 = vadd.f32 %v1721, %v1789
  %v1791 = vpop.f32.mrf.mxu0
  %v1792 = vadd.f32 %v1723, %v1791
  %1793 = vmatmul.bf16.gmra.mxu0 %v1161
  %v1794 = vpop.f32.mrf.mxu0
  %v1795 = vadd.f32 %v1726, %v1794
  %v1796 = vpop.f32.mrf.mxu0
  %v1797 = vadd.f32 %v1728, %v1796
  %1798 = vmatmul.bf16.gmra.mxu0 %v1170
  %v1799 = vpop.f32.mrf.mxu0
  %v1800 = vadd.f32 %v1731, %v1799
  %v1801 = vpop.f32.mrf.mxu0
  %v1802 = vadd.f32 %v1733, %v1801
  %1803 = vdwg.mxu0
  %1804 = vmatpush.bf16.msra.mxu0 %v1373
  %1805 = vmatpush.bf16.msra.mxu0 %v1372
  %1806 = vmatpush.bf16.msra.mxu0 %v1371
  %1807 = vmatpush.bf16.msra.mxu0 %v1370
  %1808 = vmatpush.bf16.msra.mxu0 %v1369
  %1809 = vmatpush.bf16.msra.mxu0 %v1368
  %1810 = vmatpush.bf16.msra.mxu0 %v1367
  %1811 = vmatpush.bf16.msra.mxu0 %v1366
  %1812 = vmatmul.bf16.gmra.mxu0 %v1072
  %v1813 = vpop.f32.mrf.mxu0
  %v1814 = vadd.f32 %v1745, %v1813
  %v1815 = vpop.f32.mrf.mxu0
  %v1816 = vadd.f32 %v1747, %v1815
  %1817 = vmatmul.bf16.gmra.mxu0 %v1081
  %v1818 = vpop.f32.mrf.mxu0
  %v1819 = vadd.f32 %v1750, %v1818
  %v1820 = vpop.f32.mrf.mxu0
  %v1821 = vadd.f32 %v1752, %v1820
  %1822 = vmatmul.bf16.gmra.mxu0 %v1090
  %v1823 = vpop.f32.mrf.mxu0
  %v1824 = vadd.f32 %v1755, %v1823
  %v1825 = vpop.f32.mrf.mxu0
  %v1826 = vadd.f32 %v1757, %v1825
  %1827 = vmatmul.bf16.gmra.mxu0 %v1099
  %v1828 = vpop.f32.mrf.mxu0
  %v1829 = vadd.f32 %v1760, %v1828
  %v1830 = vpop.f32.mrf.mxu0
  %v1831 = vadd.f32 %v1762, %v1830
  %1832 = vmatmul.bf16.gmra.mxu0 %v1108
  %v1833 = vpop.f32.mrf.mxu0
  %v1834 = vadd.f32 %v1765, %v1833
  %v1835 = vpop.f32.mrf.mxu0
  %v1836 = vadd.f32 %v1767, %v1835
  %1837 = vmatmul.bf16.gmra.mxu0 %v1117
  %v1838 = vpop.f32.mrf.mxu0
  %v1839 = vadd.f32 %v1770, %v1838
  %v1840 = vpop.f32.mrf.mxu0
  %v1841 = vadd.f32 %v1772, %v1840
  %1842 = vmatmul.bf16.gmra.mxu0 %v1126
  %v1843 = vpop.f32.mrf.mxu0
  %v1844 = vadd.f32 %v1775, %v1843
  %v1845 = vpop.f32.mrf.mxu0
  %v1846 = vadd.f32 %v1777, %v1845
  %1847 = vmatmul.bf16.gmra.mxu0 %v1135
  %v1848 = vpop.f32.mrf.mxu0
  %v1849 = vadd.f32 %v1780, %v1848
  %v1850 = vpop.f32.mrf.mxu0
  %v1851 = vadd.f32 %v1782, %v1850
  %1852 = vmatmul.bf16.gmra.mxu0 %v1144
  %v1853 = vpop.f32.mrf.mxu0
  %v1854 = vadd.f32 %v1785, %v1853
  %v1855 = vpop.f32.mrf.mxu0
  %v1856 = vadd.f32 %v1787, %v1855
  %1857 = vmatmul.bf16.gmra.mxu0 %v1153
  %v1858 = vpop.f32.mrf.mxu0
  %v1859 = vadd.f32 %v1790, %v1858
  %v1860 = vpop.f32.mrf.mxu0
  %v1861 = vadd.f32 %v1792, %v1860
  %1862 = vmatmul.bf16.gmra.mxu0 %v1162
  %v1863 = vpop.f32.mrf.mxu0
  %v1864 = vadd.f32 %v1795, %v1863
  %v1865 = vpop.f32.mrf.mxu0
  %v1866 = vadd.f32 %v1797, %v1865
  %1867 = vmatmul.bf16.gmra.mxu0 %v1171
  %v1868 = vpop.f32.mrf.mxu0
  %v1869 = vadd.f32 %v1800, %v1868
  %v1870 = vpop.f32.mrf.mxu0
  %v1871 = vadd.f32 %v1802, %v1870
  %1872 = vdwg.mxu0
  %1873 = vmatpush.bf16.msra.mxu0 %v1381
  %1874 = vmatpush.bf16.msra.mxu0 %v1380
  %1875 = vmatpush.bf16.msra.mxu0 %v1379
  %1876 = vmatpush.bf16.msra.mxu0 %v1378
  %1877 = vmatpush.bf16.msra.mxu0 %v1377
  %1878 = vmatpush.bf16.msra.mxu0 %v1376
  %1879 = vmatpush.bf16.msra.mxu0 %v1375
  %1880 = vmatpush.bf16.msra.mxu0 %v1374
  %1881 = vmatmul.bf16.gmra.mxu0 %v1073
  %v1882 = vpop.f32.mrf.mxu0
  %v1883 = vadd.f32 %v1814, %v1882
  %v1884 = vpop.f32.mrf.mxu0
  %v1885 = vadd.f32 %v1816, %v1884
  %1886 = vmatmul.bf16.gmra.mxu0 %v1082
  %v1887 = vpop.f32.mrf.mxu0
  %v1888 = vadd.f32 %v1819, %v1887
  %v1889 = vpop.f32.mrf.mxu0
  %v1890 = vadd.f32 %v1821, %v1889
  %1891 = vmatmul.bf16.gmra.mxu0 %v1091
  %v1892 = vpop.f32.mrf.mxu0
  %v1893 = vadd.f32 %v1824, %v1892
  %v1894 = vpop.f32.mrf.mxu0
  %v1895 = vadd.f32 %v1826, %v1894
  %1896 = vmatmul.bf16.gmra.mxu0 %v1100
  %v1897 = vpop.f32.mrf.mxu0
  %v1898 = vadd.f32 %v1829, %v1897
  %v1899 = vpop.f32.mrf.mxu0
  %v1900 = vadd.f32 %v1831, %v1899
  %1901 = vmatmul.bf16.gmra.mxu0 %v1109
  %v1902 = vpop.f32.mrf.mxu0
  %v1903 = vadd.f32 %v1834, %v1902
  %v1904 = vpop.f32.mrf.mxu0
  %v1905 = vadd.f32 %v1836, %v1904
  %1906 = vmatmul.bf16.gmra.mxu0 %v1118
  %v1907 = vpop.f32.mrf.mxu0
  %v1908 = vadd.f32 %v1839, %v1907
  %v1909 = vpop.f32.mrf.mxu0
  %v1910 = vadd.f32 %v1841, %v1909
  %1911 = vmatmul.bf16.gmra.mxu0 %v1127
  %v1912 = vpop.f32.mrf.mxu0
  %v1913 = vadd.f32 %v1844, %v1912
  %v1914 = vpop.f32.mrf.mxu0
  %v1915 = vadd.f32 %v1846, %v1914
  %1916 = vmatmul.bf16.gmra.mxu0 %v1136
  %v1917 = vpop.f32.mrf.mxu0
  %v1918 = vadd.f32 %v1849, %v1917
  %v1919 = vpop.f32.mrf.mxu0
  %v1920 = vadd.f32 %v1851, %v1919
  %1921 = vmatmul.bf16.gmra.mxu0 %v1145
  %v1922 = vpop.f32.mrf.mxu0
  %v1923 = vadd.f32 %v1854, %v1922
  %v1924 = vpop.f32.mrf.mxu0
  %v1925 = vadd.f32 %v1856, %v1924
  %1926 = vmatmul.bf16.gmra.mxu0 %v1154
  %v1927 = vpop.f32.mrf.mxu0
  %v1928 = vadd.f32 %v1859, %v1927
  %v1929 = vpop.f32.mrf.mxu0
  %v1930 = vadd.f32 %v1861, %v1929
  %1931 = vmatmul.bf16.gmra.mxu0 %v1163
  %v1932 = vpop.f32.mrf.mxu0
  %v1933 = vadd.f32 %v1864, %v1932
  %v1934 = vpop.f32.mrf.mxu0
  %v1935 = vadd.f32 %v1866, %v1934
  %1936 = vmatmul.bf16.gmra.mxu0 %v1172
  %v1937 = vpop.f32.mrf.mxu0
  %v1938 = vadd.f32 %v1869, %v1937
  %v1939 = vpop.f32.mrf.mxu0
  %v1940 = vadd.f32 %v1871, %v1939
  %1941 = vdwg.mxu0
  %1942 = vmatpush.bf16.msra.mxu0 %v1389
  %1943 = vmatpush.bf16.msra.mxu0 %v1388
  %1944 = vmatpush.bf16.msra.mxu0 %v1387
  %1945 = vmatpush.bf16.msra.mxu0 %v1386
  %1946 = vmatpush.bf16.msra.mxu0 %v1385
  %1947 = vmatpush.bf16.msra.mxu0 %v1384
  %1948 = vmatpush.bf16.msra.mxu0 %v1383
  %1949 = vmatpush.bf16.msra.mxu0 %v1382
  %1950 = vmatmul.bf16.gmra.mxu0 %v1074
  %v1951 = vpop.f32.mrf.mxu0
  %v1952 = vadd.f32 %v1883, %v1951
  %v1953 = vpop.f32.mrf.mxu0
  %v1954 = vadd.f32 %v1885, %v1953
  %1955 = vmatmul.bf16.gmra.mxu0 %v1083
  %v1956 = vpop.f32.mrf.mxu0
  %v1957 = vadd.f32 %v1888, %v1956
  %v1958 = vpop.f32.mrf.mxu0
  %v1959 = vadd.f32 %v1890, %v1958
  %1960 = vmatmul.bf16.gmra.mxu0 %v1092
  %v1961 = vpop.f32.mrf.mxu0
  %v1962 = vadd.f32 %v1893, %v1961
  %v1963 = vpop.f32.mrf.mxu0
  %v1964 = vadd.f32 %v1895, %v1963
  %1965 = vmatmul.bf16.gmra.mxu0 %v1101
  %v1966 = vpop.f32.mrf.mxu0
  %v1967 = vadd.f32 %v1898, %v1966
  %v1968 = vpop.f32.mrf.mxu0
  %v1969 = vadd.f32 %v1900, %v1968
  %1970 = vmatmul.bf16.gmra.mxu0 %v1110
  %v1971 = vpop.f32.mrf.mxu0
  %v1972 = vadd.f32 %v1903, %v1971
  %v1973 = vpop.f32.mrf.mxu0
  %v1974 = vadd.f32 %v1905, %v1973
  %1975 = vmatmul.bf16.gmra.mxu0 %v1119
  %v1976 = vpop.f32.mrf.mxu0
  %v1977 = vadd.f32 %v1908, %v1976
  %v1978 = vpop.f32.mrf.mxu0
  %v1979 = vadd.f32 %v1910, %v1978
  %1980 = vmatmul.bf16.gmra.mxu0 %v1128
  %v1981 = vpop.f32.mrf.mxu0
  %v1982 = vadd.f32 %v1913, %v1981
  %v1983 = vpop.f32.mrf.mxu0
  %v1984 = vadd.f32 %v1915, %v1983
  %1985 = vmatmul.bf16.gmra.mxu0 %v1137
  %v1986 = vpop.f32.mrf.mxu0
  %v1987 = vadd.f32 %v1918, %v1986
  %v1988 = vpop.f32.mrf.mxu0
  %v1989 = vadd.f32 %v1920, %v1988
  %1990 = vmatmul.bf16.gmra.mxu0 %v1146
  %v1991 = vpop.f32.mrf.mxu0
  %v1992 = vadd.f32 %v1923, %v1991
  %v1993 = vpop.f32.mrf.mxu0
  %v1994 = vadd.f32 %v1925, %v1993
  %1995 = vmatmul.bf16.gmra.mxu0 %v1155
  %v1996 = vpop.f32.mrf.mxu0
  %v1997 = vadd.f32 %v1928, %v1996
  %v1998 = vpop.f32.mrf.mxu0
  %v1999 = vadd.f32 %v1930, %v1998
  %2000 = vmatmul.bf16.gmra.mxu0 %v1164
  %v2001 = vpop.f32.mrf.mxu0
  %v2002 = vadd.f32 %v1933, %v2001
  %v2003 = vpop.f32.mrf.mxu0
  %v2004 = vadd.f32 %v1935, %v2003
  %2005 = vmatmul.bf16.gmra.mxu0 %v1173
  %v2006 = vpop.f32.mrf.mxu0
  %v2007 = vadd.f32 %v1938, %v2006
  %v2008 = vpop.f32.mrf.mxu0
  %v2009 = vadd.f32 %v1940, %v2008
  %2010 = vdwg.mxu0
  %vm2011 = vcmask 400384
  %2012 = vst.msk [vmem:[%s5] sm:$0xff] %vm2011, %v1952
  %2013 = vst.msk [vmem:[%s5 + $0x8] sm:$0xff] %vm2011, %v1954
  %2014 = vst.msk [vmem:[%s5 + $0x10] sm:$0xff] %vm2011, %v1957
  %2015 = vst.msk [vmem:[%s5 + $0x18] sm:$0xff] %vm2011, %v1959
  %2016 = vst.msk [vmem:[%s5 + $0x20] sm:$0xff] %vm2011, %v1962
  %2017 = vst.msk [vmem:[%s5 + $0x28] sm:$0xff] %vm2011, %v1964
  %2018 = vst.msk [vmem:[%s5 + $0x30] sm:$0xff] %vm2011, %v1967
  %2019 = vst.msk [vmem:[%s5 + $0x38] sm:$0xff] %vm2011, %v1969
  %2020 = vst.msk [vmem:[%s5 + $0x40] sm:$0xff] %vm2011, %v1972
  %2021 = vst.msk [vmem:[%s5 + $0x48] sm:$0xff] %vm2011, %v1974
  %2022 = vst.msk [vmem:[%s5 + $0x50] sm:$0xff] %vm2011, %v1977
  %2023 = vst.msk [vmem:[%s5 + $0x58] sm:$0xff] %vm2011, %v1979
  %2024 = vst.msk [vmem:[%s5 + $0x60] sm:$0xff] %vm2011, %v1982
  %2025 = vst.msk [vmem:[%s5 + $0x68] sm:$0xff] %vm2011, %v1984
  %2026 = vst.msk [vmem:[%s5 + $0x70] sm:$0xff] %vm2011, %v1987
  %2027 = vst.msk [vmem:[%s5 + $0x78] sm:$0xff] %vm2011, %v1989
  %2028 = vst.msk [vmem:[%s5 + $0x80] sm:$0xff] %vm2011, %v1992
  %2029 = vst.msk [vmem:[%s5 + $0x88] sm:$0xff] %vm2011, %v1994
  %2030 = vst.msk [vmem:[%s5 + $0x90] sm:$0xff] %vm2011, %v1997
  %2031 = vst.msk [vmem:[%s5 + $0x98] sm:$0xff] %vm2011, %v1999
  %2032 = vst.msk [vmem:[%s5 + $0xa0] sm:$0xff] %vm2011, %v2002
  %2033 = vst.msk [vmem:[%s5 + $0xa8] sm:$0xff] %vm2011, %v2004
  %2034 = vst.msk [vmem:[%s5 + $0xb0] sm:$0xff] %vm2011, %v2007
  %2035 = vst.msk [vmem:[%s5 + $0xb8] sm:$0xff] %vm2011, %v2009
  // Predicated region
  $region22: #{se_conv_forward.1} parent=0 // pred_check
    _
  $region23: #{se_conv_forward.1} parent=0 // pred_check_branch
    %2037 = sbr.rel (0) target = $region25
  $region24: #{se_conv_forward.1} parent=0 // pred_region
    _
  $region25: #{se_conv_forward.1} parent=0 // pred_fallthru
    _
  // Predicated region
  $region26: #{se_conv_forward.1} parent=0 // pred_check
    _
  $region27: #{se_conv_forward.1} parent=0 // pred_check_branch
    %2039 = sbr.rel (0) target = $region29
  $region28: #{se_conv_forward.1} parent=0 // pred_region
    _
  $region29: #{se_conv_forward.1} parent=0 // pred_fallthru
    _

</llo_original>
